<compile_context>
chip_gen: v7x
topology: tpu7x:2x2x1
jax: 0.10.0
libtpu: 0.0.40
codegen_flags: <defaults>
</compile_context>

<pallas_src>
import jax
import jax.numpy as jnp
from jax import lax
from jax.experimental import pallas as pl
from jax.experimental.pallas import tpu as pltpu

EPS = 1e-5                      # nn.GroupNorm default eps
MXU_INPUT_DTYPE = jnp.float32   # bf16 knob for v6e/v7x (see TODO above)


def _make_kernel(H, WC):
    """WC = W * C (channels already folded onto the lane axis)."""

    def kernel(x_ref, B_ref, gmat_ref, p_ref, o_ref, pad_ref):
        gmat = gmat_ref[...]                                   # (WC, WC) f32

        # Zero only the 1-row halo (interior is fully overwritten below).
        zrow = jnp.zeros((1, WC), dtype=pad_ref.dtype)
        pad_ref[0:1, :] = zrow
        pad_ref[H + 1:H + 2, :] = zrow

        def stage(inp, B, bias, gamma, beta):
            """conv3x3 (banded matmul) + bias + GroupNorm + ReLU -> (H, WC) f32."""
            inp_c = inp.astype(pad_ref.dtype)
            pad_ref[1:H + 1, :] = inp_c                        # row-padded copy
            # Three row-shifted slabs, concatenated at 128-aligned lane offsets
            # (full-vreg placement, no lane relayout).  Middle slab reuses the
            # in-register value.
            slabs = jnp.concatenate(
                [pad_ref[0:H, :], inp_c, pad_ref[2:H + 2, :]], axis=1)  # (H, 3*WC)
            acc = jnp.dot(slabs, B, preferred_element_type=jnp.float32) + bias  # (H, WC)

            # GroupNorm, single pass, ONE stats matmul: (2, WC) @ (WC, WC).
            s = jnp.sum(acc, axis=0, keepdims=True)            # (1, WC)
            sq = jnp.sum(acc * acc, axis=0, keepdims=True)     # (1, WC)
            stats = jnp.concatenate([s, sq], axis=0)           # (2, WC)
            m = jnp.dot(stats, gmat, preferred_element_type=jnp.float32)
            mean = m[0:1, :]                                   # per-group mean, per lane
            var = jnp.maximum(m[1:2, :] - mean * mean, 0.0)    # biased variance
            inv = lax.rsqrt(var + EPS)
            y = (acc - mean) * (inv * gamma) + beta
            return jnp.maximum(y, 0.0)                         # ReLU

        x = x_ref[0]                                           # (H, WC) f32, lane-dense
        y1 = stage(x, B_ref[0], p_ref[0:1, :], p_ref[1:2, :], p_ref[2:3, :])
        y2 = stage(y1, B_ref[1], p_ref[3:4, :], p_ref[4:5, :], p_ref[5:6, :])

        # Residual add + ReLU; output is already lane-dense -> one unmasked store.
        o_ref[0] = jnp.maximum(x + y2, 0.0)

    return kernel


def _banded_conv_matrix(w_hwio, W):
    """HWIO (3,3,Cin,Cout) conv weights -> block-banded (3*W*Cin, W*Cout) matrix.

    Row index  = kh*(W*Cin) + w_in*Cin + ci   (matching the 3 concatenated slabs)
    Col index  = w_out*Cout + co
    Entry      = w[kh, w_in - w_out + 1, ci, co] if |w_in - w_out| <= 1 else 0
    (zeros encode the dx zero-padding of the conv).
    """
    _, _, Cin, Cout = w_hwio.shape
    wp = jnp.arange(W)[:, None]            # input pixel
    wo = jnp.arange(W)[None, :]            # output pixel
    kw = wp - wo + 1
    valid = (kw >= 0) & (kw <= 2)
    kwc = jnp.clip(kw, 0, 2)
    blocks = []
    for kh in range(3):
        sel = w_hwio[kh][kwc]                                   # (W, W, Cin, Cout)
        sel = jnp.where(valid[:, :, None, None], sel, 0.0)
        blocks.append(sel.transpose(0, 2, 1, 3).reshape(W * Cin, W * Cout))
    return jnp.concatenate(blocks, axis=0)                      # (3*W*Cin, W*Cout)


def residual_block_forward(x_nchw, params):
    """ResidualBlock.forward (norm_fn='group', stride=1) as a single fused Pallas kernel."""
    # TODO(synk): if this block sits inside a larger NHWC pipeline, drop these
    # boundary transposes (each is a full extra HBM pass done by XLA).
    x = jnp.transpose(x_nchw, (0, 2, 3, 1)).astype(jnp.float32)   # NCHW -> NHWC
    N, H, W, Cin = x.shape
    Cout = params["w1"].shape[-1]
    G = params["num_groups"]
    Cg = Cout // G
    assert Cin == Cout, "stride=1 residual path requires in_planes == planes"
    WC = W * Cout

    x = x.reshape(N, H, W * Cin)                                  # lane-dense input

    # Banded conv matrices (built once, outside the kernel).
    B1 = _banded_conv_matrix(params["w1"].astype(jnp.float32), W).astype(MXU_INPUT_DTYPE)
    B2 = _banded_conv_matrix(params["w2"].astype(jnp.float32), W).astype(MXU_INPUT_DTYPE)
    Bstack = jnp.stack([B1, B2], axis=0)                          # (2, 3*WC, WC)

    # Group-average matrix on the lane-dense layout: gmat[w*C+c, w2*C+c2] =
    # 1/(H*W*Cg) iff c and c2 share a group.  (sum-row @ gmat) yields the
    # per-group mean already broadcast to every (w, c) lane.
    grp = jnp.arange(Cout) // Cg
    grp_full = jnp.tile(grp, W)                                   # (WC,)
    gmat = (grp_full[:, None] == grp_full[None, :]).astype(jnp.float32) / float(H * W * Cg)

    # bias / gamma / beta pre-tiled to the lane-dense layout, stacked into one input.
    tile = lambda v: jnp.tile(v.reshape(-1).astype(jnp.float32), W)   # (WC,)
    pvec = jnp.stack([tile(params["b1"]), tile(params["g1"]), tile(params["be1"]),
                      tile(params["b2"]), tile(params["g2"]), tile(params["be2"])],
                     axis=0)                                      # (6, WC)

    kernel = _make_kernel(H, WC)

    in_specs = [
        pl.BlockSpec((1, H, W * Cin), lambda n: (n, 0, 0)),       # x (lane-dense)
        pl.BlockSpec((2, 3 * W * Cin, WC), lambda n: (0, 0, 0)),  # banded conv weights
        pl.BlockSpec((WC, WC), lambda n: (0, 0)),                 # group-average matrix
        pl.BlockSpec((6, WC), lambda n: (0, 0)),                  # bias/gamma/beta (tiled)
    ]

    out = pl.pallas_call(
        kernel,
        out_shape=jax.ShapeDtypeStruct((N, H, WC), jnp.float32),
        grid=(N,),
        in_specs=in_specs,
        out_specs=pl.BlockSpec((1, H, WC), lambda n: (n, 0, 0)),
        scratch_shapes=[
            pltpu.VMEM((H + 2, WC), MXU_INPUT_DTYPE),             # row-padded activation
        ],
        compiler_params=pltpu.CompilerParams(
            dimension_semantics=("parallel",),                    # batch iters independent
            vmem_limit_bytes=32 * 1024 * 1024,                    # explicit budget (all gens)
        ),
    )(x, Bstack, gmat, pvec)

    out = out.reshape(N, H, W, Cout)
    return jnp.transpose(out, (0, 3, 1, 2))                       # NHWC -> NCHW


# ------------------------------ pure-JAX reference ---------------------------
def _ref_conv(x, w_hwio, b):
    y = lax.conv_general_dilated(
        x, w_hwio, window_strides=(1, 1), padding="SAME",
        dimension_numbers=("NHWC", "HWIO", "NHWC"))
    return y + b[None, None, None, :]


def _ref_gn(y, gamma, beta, G):
    N, H, W, C = y.shape
    yr = y.reshape(N, H, W, G, C // G)
    mean = yr.mean(axis=(1, 2, 4), keepdims=True)
    var = ((yr - mean) ** 2).mean(axis=(1, 2, 4), keepdims=True)
    yr = (yr - mean) / jnp.sqrt(var + EPS)
    return (yr.reshape(N, H, W, C) * gamma[None, None, None, :]
            + beta[None, None, None, :])


def residual_block_ref(x_nchw, params):
    x = jnp.transpose(x_nchw, (0, 2, 3, 1))
    G = params["num_groups"]
    y = jax.nn.relu(_ref_gn(_ref_conv(x, params["w1"], params["b1"]),
                            params["g1"], params["be1"], G))
    y = jax.nn.relu(_ref_gn(_ref_conv(y, params["w2"], params["b2"]),
                            params["g2"], params["be2"], G))
    out = jax.nn.relu(x + y)
    return jnp.transpose(out, (0, 3, 1, 2))


# ----------------------------------- main ------------------------------------
if __name__ == "__main__":
    key = jax.random.PRNGKey(0)
    N, in_planes, planes, Hs = 2, 16, 16, 16   # stride=1 => in_planes == planes
    num_groups = planes // 8

    k = jax.random.split(key, 9)
    scale1 = 1.0 / jnp.sqrt(3.0 * 3.0 * in_planes)
    scale2 = 1.0 / jnp.sqrt(3.0 * 3.0 * planes)
    params = {
        "num_groups": num_groups,
        # conv weights in HWIO (kh, kw, Cin, Cout)
        "w1": jax.random.normal(k[0], (3, 3, in_planes, planes), jnp.float32) * scale1,
        "b1": jax.random.normal(k[1], (planes,), jnp.float32) * 0.1,
        "g1": 1.0 + 0.1 * jax.random.normal(k[2], (planes,), jnp.float32),
        "be1": 0.1 * jax.random.normal(k[3], (planes,), jnp.float32),
        "w2": jax.random.normal(k[4], (3, 3, planes, planes), jnp.float32) * scale2,
        "b2": jax.random.normal(k[5], (planes,), jnp.float32) * 0.1,
        "g2": 1.0 + 0.1 * jax.random.normal(k[6], (planes,), jnp.float32),
        "be2": 0.1 * jax.random.normal(k[7], (planes,), jnp.float32),
    }

    x = jax.random.normal(k[8], (N, in_planes, Hs, Hs), jnp.float32)

    out = residual_block_forward(x, params)
    out = jax.block_until_ready(out)

    ref = residual_block_ref(x, params)
    assert out.shape == (N, planes, Hs, Hs), out.shape
    assert jnp.allclose(out, ref, atol=1e-3, rtol=1e-3), (
        float(jnp.max(jnp.abs(out - ref))))

    print("KERNEL_OK")
</pallas_src>

<mosaic_0001>
module attributes {stable_mosaic.version = 11 : i64} {
  func.func @kernel(%arg0: i32, %arg1: memref<1x16x256xf32, #tpu.memory_space<vmem>>, %arg2: memref<2x768x256xf32, #tpu.memory_space<vmem>>, %arg3: memref<256x256xf32, #tpu.memory_space<vmem>>, %arg4: memref<6x256xf32, #tpu.memory_space<vmem>>, %arg5: memref<1x16x256xf32, #tpu.memory_space<vmem>>, %arg6: memref<18x256xf32, #tpu.memory_space<vmem>>) attributes {dimension_semantics = [#tpu.dimension_semantics<parallel>], iteration_bounds = array<i64: 2>, scalar_prefetch = 0 : i64, scratch_operands = 1 : i64, tpu.core_type = #tpu.core_type<tc>, window_params = [{transform_indices = @transform_0, window_bounds = array<i64: 1, 16, 256>}, {pipeline_mode = #tpu.pipeline_mode<synchronous>, transform_indices = @transform_1, window_bounds = array<i64: 2, 768, 256>}, {pipeline_mode = #tpu.pipeline_mode<synchronous>, transform_indices = @transform_2, window_bounds = array<i64: 256, 256>}, {pipeline_mode = #tpu.pipeline_mode<synchronous>, transform_indices = @transform_3, window_bounds = array<i64: 6, 256>}, {transform_indices = @transform_4, window_bounds = array<i64: 1, 16, 256>}]} {
    %c0 = arith.constant 0 : index
    %c0_0 = arith.constant 0 : index
    %0 = vector.load %arg3[%c0, %c0_0] : memref<256x256xf32, #tpu.memory_space<vmem>>, vector<256x256xf32>
    %cst = arith.constant 0.000000e+00 : f32
    %1 = vector.broadcast %cst : f32 to vector<1x256xf32>
    %c0_1 = arith.constant 0 : index
    %c0_2 = arith.constant 0 : index
    %2 = vector.load %arg6[%c0_1, %c0_2] : memref<18x256xf32, #tpu.memory_space<vmem>>, vector<1x256xf32>
    tpu.vector_store %arg6[%c0_1, %c0_2], %1 {strides = array<i32>} : memref<18x256xf32, #tpu.memory_space<vmem>>, vector<1x256xf32>,
    %c17 = arith.constant 17 : index
    %c0_3 = arith.constant 0 : index
    %3 = vector.load %arg6[%c17, %c0_3] : memref<18x256xf32, #tpu.memory_space<vmem>>, vector<1x256xf32>
    tpu.vector_store %arg6[%c17, %c0_3], %1 {strides = array<i32>} : memref<18x256xf32, #tpu.memory_space<vmem>>, vector<1x256xf32>,
    %c0_4 = arith.constant 0 : index
    %c0_5 = arith.constant 0 : index
    %c0_6 = arith.constant 0 : index
    %4 = vector.load %arg1[%c0_4, %c0_5, %c0_6] : memref<1x16x256xf32, #tpu.memory_space<vmem>>, vector<1x16x256xf32>
    %5 = vector.shape_cast %4 : vector<1x16x256xf32> to vector<16x256xf32>
    %c0_7 = arith.constant 0 : index
    %c0_8 = arith.constant 0 : index
    %c0_9 = arith.constant 0 : index
    %6 = vector.load %arg2[%c0_7, %c0_8, %c0_9] : memref<2x768x256xf32, #tpu.memory_space<vmem>>, vector<1x768x256xf32>
    %7 = vector.shape_cast %6 : vector<1x768x256xf32> to vector<768x256xf32>
    %c0_10 = arith.constant 0 : index
    %c0_11 = arith.constant 0 : index
    %8 = vector.load %arg4[%c0_10, %c0_11] : memref<6x256xf32, #tpu.memory_space<vmem>>, vector<1x256xf32>
    %c1 = arith.constant 1 : index
    %c0_12 = arith.constant 0 : index
    %9 = vector.load %arg4[%c1, %c0_12] : memref<6x256xf32, #tpu.memory_space<vmem>>, vector<1x256xf32>
    %c2 = arith.constant 2 : index
    %c0_13 = arith.constant 0 : index
    %10 = vector.load %arg4[%c2, %c0_13] : memref<6x256xf32, #tpu.memory_space<vmem>>, vector<1x256xf32>
    %c1_14 = arith.constant 1 : index
    %c0_15 = arith.constant 0 : index
    %11 = vector.load %arg6[%c1_14, %c0_15] : memref<18x256xf32, #tpu.memory_space<vmem>>, vector<16x256xf32>
    tpu.vector_store %arg6[%c1_14, %c0_15], %5 {strides = array<i32>} : memref<18x256xf32, #tpu.memory_space<vmem>>, vector<16x256xf32>,
    %c0_16 = arith.constant 0 : index
    %c0_17 = arith.constant 0 : index
    %12 = vector.load %arg6[%c0_16, %c0_17] : memref<18x256xf32, #tpu.memory_space<vmem>>, vector<16x256xf32>
    %c2_18 = arith.constant 2 : index
    %c0_19 = arith.constant 0 : index
    %13 = vector.load %arg6[%c2_18, %c0_19] : memref<18x256xf32, #tpu.memory_space<vmem>>, vector<16x256xf32>
    %14 = tpu.concatenate %12, %5, %13 in 1 : vector<16x256xf32>, vector<16x256xf32>, vector<16x256xf32> -> vector<16x768xf32>
    %cst_20 = arith.constant dense<0.000000e+00> : vector<16x256xf32>
    %15 = tpu.matmul %14, %7, %cst_20 {dimension_numbers = #tpu.dot_dimension_numbers<[1], [0], [0], [1], [0, 0, 1, 1], [], []>} : vector<16x768xf32>, vector<768x256xf32>, vector<16x256xf32> -> vector<16x256xf32>
    %16 = vector.broadcast %8 : vector<1x256xf32> to vector<16x256xf32>
    %17 = arith.addf %15, %16 : vector<16x256xf32>
    %cst_21 = arith.constant dense<0.000000e+00> : vector<256xf32>
    %18 = vector.multi_reduction <add>, %17, %cst_21 [0] : vector<16x256xf32> to vector<256xf32>
    %19 = vector.shape_cast %18 : vector<256xf32> to vector<1x256xf32>
    %20 = arith.mulf %17, %17 : vector<16x256xf32>
    %cst_22 = arith.constant dense<0.000000e+00> : vector<256xf32>
    %21 = vector.multi_reduction <add>, %20, %cst_22 [0] : vector<16x256xf32> to vector<256xf32>
    %22 = vector.shape_cast %21 : vector<256xf32> to vector<1x256xf32>
    %23 = tpu.concatenate %19, %22 in 0 : vector<1x256xf32>, vector<1x256xf32> -> vector<2x256xf32>
    %cst_23 = arith.constant dense<0.000000e+00> : vector<2x256xf32>
    %24 = tpu.matmul %23, %0, %cst_23 {dimension_numbers = #tpu.dot_dimension_numbers<[1], [0], [0], [1], [0, 0, 1, 1], [], []>} : vector<2x256xf32>, vector<256x256xf32>, vector<2x256xf32> -> vector<2x256xf32>
    %25 = vector.extract_strided_slice %24 {offsets = [0, 0], sizes = [1, 256], strides = [1, 1]} : vector<2x256xf32> to vector<1x256xf32>
    %26 = vector.extract_strided_slice %24 {offsets = [1, 0], sizes = [1, 256], strides = [1, 1]} : vector<2x256xf32> to vector<1x256xf32>
    %27 = arith.mulf %25, %25 : vector<1x256xf32>
    %28 = arith.subf %26, %27 : vector<1x256xf32>
    %cst_24 = arith.constant 0.000000e+00 : f32
    %29 = vector.broadcast %cst_24 : f32 to vector<1x256xf32>
    %30 = arith.maximumf %28, %29 : vector<1x256xf32>
    %cst_25 = arith.constant 9.99999974E-6 : f32
    %31 = vector.broadcast %cst_25 : f32 to vector<1x256xf32>
    %32 = arith.addf %30, %31 : vector<1x256xf32>
    %33 = math.rsqrt %32 : vector<1x256xf32>
    %34 = vector.broadcast %25 : vector<1x256xf32> to vector<16x256xf32>
    %35 = arith.subf %17, %34 : vector<16x256xf32>
    %36 = arith.mulf %33, %9 : vector<1x256xf32>
    %37 = vector.broadcast %36 : vector<1x256xf32> to vector<16x256xf32>
    %38 = arith.mulf %35, %37 : vector<16x256xf32>
    %39 = vector.broadcast %10 : vector<1x256xf32> to vector<16x256xf32>
    %40 = arith.addf %38, %39 : vector<16x256xf32>
    %cst_26 = arith.constant 0.000000e+00 : f32
    %41 = vector.broadcast %cst_26 : f32 to vector<16x256xf32>
    %42 = arith.maximumf %40, %41 : vector<16x256xf32>
    %c1_27 = arith.constant 1 : index
    %c0_28 = arith.constant 0 : index
    %c0_29 = arith.constant 0 : index
    %43 = vector.load %arg2[%c1_27, %c0_28, %c0_29] : memref<2x768x256xf32, #tpu.memory_space<vmem>>, vector<1x768x256xf32>
    %44 = vector.shape_cast %43 : vector<1x768x256xf32> to vector<768x256xf32>
    %c3 = arith.constant 3 : index
    %c0_30 = arith.constant 0 : index
    %45 = vector.load %arg4[%c3, %c0_30] : memref<6x256xf32, #tpu.memory_space<vmem>>, vector<1x256xf32>
    %c4 = arith.constant 4 : index
    %c0_31 = arith.constant 0 : index
    %46 = vector.load %arg4[%c4, %c0_31] : memref<6x256xf32, #tpu.memory_space<vmem>>, vector<1x256xf32>
    %c5 = arith.constant 5 : index
    %c0_32 = arith.constant 0 : index
    %47 = vector.load %arg4[%c5, %c0_32] : memref<6x256xf32, #tpu.memory_space<vmem>>, vector<1x256xf32>
    %c1_33 = arith.constant 1 : index
    %c0_34 = arith.constant 0 : index
    %48 = vector.load %arg6[%c1_33, %c0_34] : memref<18x256xf32, #tpu.memory_space<vmem>>, vector<16x256xf32>
    tpu.vector_store %arg6[%c1_33, %c0_34], %42 {strides = array<i32>} : memref<18x256xf32, #tpu.memory_space<vmem>>, vector<16x256xf32>,
    %c0_35 = arith.constant 0 : index
    %c0_36 = arith.constant 0 : index
    %49 = vector.load %arg6[%c0_35, %c0_36] : memref<18x256xf32, #tpu.memory_space<vmem>>, vector<16x256xf32>
    %c2_37 = arith.constant 2 : index
    %c0_38 = arith.constant 0 : index
    %50 = vector.load %arg6[%c2_37, %c0_38] : memref<18x256xf32, #tpu.memory_space<vmem>>, vector<16x256xf32>
    %51 = tpu.concatenate %49, %42, %50 in 1 : vector<16x256xf32>, vector<16x256xf32>, vector<16x256xf32> -> vector<16x768xf32>
    %cst_39 = arith.constant dense<0.000000e+00> : vector<16x256xf32>
    %52 = tpu.matmul %51, %44, %cst_39 {dimension_numbers = #tpu.dot_dimension_numbers<[1], [0], [0], [1], [0, 0, 1, 1], [], []>} : vector<16x768xf32>, vector<768x256xf32>, vector<16x256xf32> -> vector<16x256xf32>
    %53 = vector.broadcast %45 : vector<1x256xf32> to vector<16x256xf32>
    %54 = arith.addf %52, %53 : vector<16x256xf32>
    %cst_40 = arith.constant dense<0.000000e+00> : vector<256xf32>
    %55 = vector.multi_reduction <add>, %54, %cst_40 [0] : vector<16x256xf32> to vector<256xf32>
    %56 = vector.shape_cast %55 : vector<256xf32> to vector<1x256xf32>
    %57 = arith.mulf %54, %54 : vector<16x256xf32>
    %cst_41 = arith.constant dense<0.000000e+00> : vector<256xf32>
    %58 = vector.multi_reduction <add>, %57, %cst_41 [0] : vector<16x256xf32> to vector<256xf32>
    %59 = vector.shape_cast %58 : vector<256xf32> to vector<1x256xf32>
    %60 = tpu.concatenate %56, %59 in 0 : vector<1x256xf32>, vector<1x256xf32> -> vector<2x256xf32>
    %cst_42 = arith.constant dense<0.000000e+00> : vector<2x256xf32>
    %61 = tpu.matmul %60, %0, %cst_42 {dimension_numbers = #tpu.dot_dimension_numbers<[1], [0], [0], [1], [0, 0, 1, 1], [], []>} : vector<2x256xf32>, vector<256x256xf32>, vector<2x256xf32> -> vector<2x256xf32>
    %62 = vector.extract_strided_slice %61 {offsets = [0, 0], sizes = [1, 256], strides = [1, 1]} : vector<2x256xf32> to vector<1x256xf32>
    %63 = vector.extract_strided_slice %61 {offsets = [1, 0], sizes = [1, 256], strides = [1, 1]} : vector<2x256xf32> to vector<1x256xf32>
    %64 = arith.mulf %62, %62 : vector<1x256xf32>
    %65 = arith.subf %63, %64 : vector<1x256xf32>
    %cst_43 = arith.constant 0.000000e+00 : f32
    %66 = vector.broadcast %cst_43 : f32 to vector<1x256xf32>
    %67 = arith.maximumf %65, %66 : vector<1x256xf32>
    %cst_44 = arith.constant 9.99999974E-6 : f32
    %68 = vector.broadcast %cst_44 : f32 to vector<1x256xf32>
    %69 = arith.addf %67, %68 : vector<1x256xf32>
    %70 = math.rsqrt %69 : vector<1x256xf32>
    %71 = vector.broadcast %62 : vector<1x256xf32> to vector<16x256xf32>
    %72 = arith.subf %54, %71 : vector<16x256xf32>
    %73 = arith.mulf %70, %46 : vector<1x256xf32>
    %74 = vector.broadcast %73 : vector<1x256xf32> to vector<16x256xf32>
    %75 = arith.mulf %72, %74 : vector<16x256xf32>
    %76 = vector.broadcast %47 : vector<1x256xf32> to vector<16x256xf32>
    %77 = arith.addf %75, %76 : vector<16x256xf32>
    %cst_45 = arith.constant 0.000000e+00 : f32
    %78 = vector.broadcast %cst_45 : f32 to vector<16x256xf32>
    %79 = arith.maximumf %77, %78 : vector<16x256xf32>
    %80 = arith.addf %5, %79 : vector<16x256xf32>
    %cst_46 = arith.constant 0.000000e+00 : f32
    %81 = vector.broadcast %cst_46 : f32 to vector<16x256xf32>
    %82 = arith.maximumf %80, %81 : vector<16x256xf32>
    %c0_47 = arith.constant 0 : index
    %c0_48 = arith.constant 0 : index
    %c0_49 = arith.constant 0 : index
    %83 = vector.load %arg5[%c0_47, %c0_48, %c0_49] : memref<1x16x256xf32, #tpu.memory_space<vmem>>, vector<1x16x256xf32>
    %84 = vector.shape_cast %83 : vector<1x16x256xf32> to vector<16x256xf32>
    %85 = vector.shape_cast %82 : vector<16x256xf32> to vector<1x16x256xf32>
    tpu.vector_store %arg5[%c0_47, %c0_48, %c0_49], %85 {strides = array<i32>} : memref<1x16x256xf32, #tpu.memory_space<vmem>>, vector<1x16x256xf32>,
    return
  }
  func.func @transform_0(%arg0: i32) -> (i32, i32, i32) {
    %c0_i32 = arith.constant 0 : i32
    %c0_i32_0 = arith.constant 0 : i32
    %c0_i32_1 = arith.constant 0 : i32
    return %arg0, %c0_i32, %c0_i32_0 : i32, i32, i32
  }
  func.func @transform_1(%arg0: i32) -> (i32, i32, i32) {
    %c0_i32 = arith.constant 0 : i32
    %c0_i32_0 = arith.constant 0 : i32
    %c0_i32_1 = arith.constant 0 : i32
    %c0_i32_2 = arith.constant 0 : i32
    return %c0_i32, %c0_i32_0, %c0_i32_1 : i32, i32, i32
  }
  func.func @transform_2(%arg0: i32) -> (i32, i32) {
    %c0_i32 = arith.constant 0 : i32
    %c0_i32_0 = arith.constant 0 : i32
    %c0_i32_1 = arith.constant 0 : i32
    return %c0_i32, %c0_i32_0 : i32, i32
  }
  func.func @transform_3(%arg0: i32) -> (i32, i32) {
    %c0_i32 = arith.constant 0 : i32
    %c0_i32_0 = arith.constant 0 : i32
    %c0_i32_1 = arith.constant 0 : i32
    return %c0_i32, %c0_i32_0 : i32, i32
  }
  func.func @transform_4(%arg0: i32) -> (i32, i32, i32) {
    %c0_i32 = arith.constant 0 : i32
    %c0_i32_0 = arith.constant 0 : i32
    %c0_i32_1 = arith.constant 0 : i32
    return %arg0, %c0_i32, %c0_i32_0 : i32, i32, i32
  }
}

</mosaic_0001>

<llo_original>
// kernel: tpu_custom_call.1
$region0: #{tpu_custom_call.1}
  #allocation0 [shape = 'u32[]', space=smem, size = 0x4, offset = 0x4, fixed_abs, tag = 'smem constant byte address 0x4 - core index']
  #allocation1 [shape = 'u32[144,128]{1,0:T(1,128)}', space=vmem, size = 0x12000, scoped, tag = 'internal scratch']
  #allocation2 [shape = 'f32[18,256]{1,0:T(8,128)}', space=vmem, size = 0x6000, scoped, tag = 'scratch operand']
  %s0 = inlined_call_operand.hbm [shape: f32[2,16,256], index: 0, kind: input, shape index: {}]
  %s1 = inlined_call_operand.hbm [shape: f32[2,768,256], index: 1, kind: input, shape index: {}]
  %s2 = inlined_call_operand.hbm [shape: f32[256,256], index: 2, kind: input, shape index: {}]
  %s3 = inlined_call_operand.hbm [shape: f32[6,256], index: 3, kind: input, shape index: {}]
  %s4 = inlined_call_operand.hbm [shape: f32[2,16,256], index: 4, kind: output, shape index: {}]
  %s5 = sld [smem:[#allocation0]]
  $region65: #{tpu_custom_call.1} parent=0
    _
  %s7 = ssub.s32 1, %s5
  %s8 = scalar_select 0, %s7, %s5
  $region1: #{tpu_custom_call.1} parent=0
    #allocation3 [shape = 'u8[32768]{0}', space=vmem, size = 0x8000, scoped, tag = 'input window, operand 0']
    #allocation4 [shape = 's32[2]{0}', space=sflag, size = 0x8, scoped, tag = 'scoped memory for tpu_custom_call.1']
    #allocation5 [shape = 's32[2]{0}', space=sflag, size = 0x8, scoped, tag = 'scoped memory for tpu_custom_call.1']
    #allocation6 [shape = 'u8[1572864]{0}', space=vmem, size = 0x180000, scoped, tag = 'input window, operand 1, single buffered']
    #allocation7 [shape = 's32[1]{0}', space=sflag, size = 0x4, scoped, tag = 'scoped memory for tpu_custom_call.1']
    #allocation8 [shape = 'u8[262144]{0}', space=vmem, size = 0x40000, scoped, tag = 'input window, operand 2, single buffered']
    #allocation9 [shape = 'u8[8192]{0}', space=vmem, size = 0x2000, scoped, tag = 'input window, operand 3, single buffered']
    #allocation10 [shape = 's32[1]{0}', space=sflag, size = 0x4, scoped, tag = 'scoped memory for tpu_custom_call.1']
    #allocation11 [shape = 'u8[32768]{0}', space=vmem, size = 0x8000, scoped, tag = 'output window, operand 0']
    %9 = vsyncpa [#allocation4], 0
    %s10 = scalar_lea.sflag [#allocation4], 1
    %11 = vsyncpa %s10, 0
    %12 = vsyncpa [#allocation7], 0
    %13 = vsyncpa [#allocation10], 0
    %14 = vsyncpa [#allocation5], 0
    %s15 = scalar_lea.sflag [#allocation5], 1
    %16 = vsyncpa %s15, 0
    loop: start=0, step=1, limit=4
    $region2: #{tpu_custom_call.1} parent=1 // loop_pre_header
      _
    $region3: #{tpu_custom_call.1} parent=1 // loop_header
      %s18 = sphi 0, %s22
      %p19 = scmp.ge.s32.totalorder %s18, 4
      %s28 = sphi 0, %s30
      %s31 = sphi 0, %s28
      %s32 = sphi 0, %s31
      %s48 = sphi 0, %s32
      %s52 = sphi 0, %s52
      %s54 = sphi 0, %s52
      %s55 = sphi 0, %s54
      %s69 = sphi 0, %s55
      %s73 = sphi 0, %s73
      %s75 = sphi 0, %s73
      %s76 = sphi 0, %s75
      %s90 = sphi 0, %s76
      %s94 = sphi 0, %s94
      %s96 = sphi 0, %s94
      %s97 = sphi 0, %s96
      %s111 = sphi 0, %s97
      %s117 = sphi 0, %s119
      %s120 = sphi 0, %s117
      %s121 = sphi 0, %s120
      %s137 = sphi 0, %s121
    $region4: #{tpu_custom_call.1} parent=1 // loop_header_branch
      %21 = sbr.rel (%p19) target = $region8
    $region5: #{tpu_custom_call.1} parent=1 // loop_body
      %s23 = ssub.s32 %s18, 1
      %s24 = ssub.s32 %s18, 2
      %s25 = sadd.s32 %s18, 1
      %s26 = ssub.s32 %s18, %s25
      %p27 = scmp.eq.s32.totalorder %s26, 0
      %s29 = sadd.s32 %s28, 1
      %s30 = scalar_select %p27, %s28, %s29
      %p33 = pneg %p27
      %p34 = scmp.eq.s32.totalorder %s18, 1
      %p35 = por %p33, %p34
      %p36 = scmp.ne.s32.totalorder %s28, %s31
      %p37 = scmp.eq.s32.totalorder %s18, 0
      %p38 = por %p36, %p37
      %p39 = scmp.ne.s32.totalorder %s28, %s31
      %p40 = scmp.eq.s32.totalorder %s23, 1
      %p41 = por %p39, %p40
      %p42 = scmp.ne.s32.totalorder %s31, %s32
      %p43 = scmp.eq.s32.totalorder %s23, 0
      %p44 = por %p42, %p43
      %p45 = scmp.ne.s32.totalorder %s31, %s32
      %p46 = scmp.eq.s32.totalorder %s24, 1
      %p47 = por %p45, %p46
      %p49 = scmp.ne.s32.totalorder %s32, %s48
      %p50 = scmp.eq.s32.totalorder %s24, 0
      %p51 = por %p49, %p50
      %s53 = sadd.s32 %s52, 1
      %p56 = scmp.eq.s32.totalorder %s18, 1
      %p57 = scmp.ne.s32.totalorder %s52, %s54
      %p58 = scmp.eq.s32.totalorder %s18, 0
      %p59 = por %p57, %p58
      %p60 = scmp.ne.s32.totalorder %s52, %s54
      %p61 = scmp.eq.s32.totalorder %s23, 1
      %p62 = por %p60, %p61
      %p63 = scmp.ne.s32.totalorder %s54, %s55
      %p64 = scmp.eq.s32.totalorder %s23, 0
      %p65 = por %p63, %p64
      %p66 = scmp.ne.s32.totalorder %s54, %s55
      %p67 = scmp.eq.s32.totalorder %s24, 1
      %p68 = por %p66, %p67
      %p70 = scmp.ne.s32.totalorder %s55, %s69
      %p71 = scmp.eq.s32.totalorder %s24, 0
      %p72 = por %p70, %p71
      %s74 = sadd.s32 %s73, 1
      %p77 = scmp.eq.s32.totalorder %s18, 1
      %p78 = scmp.ne.s32.totalorder %s73, %s75
      %p79 = scmp.eq.s32.totalorder %s18, 0
      %p80 = por %p78, %p79
      %p81 = scmp.ne.s32.totalorder %s73, %s75
      %p82 = scmp.eq.s32.totalorder %s23, 1
      %p83 = por %p81, %p82
      %p84 = scmp.ne.s32.totalorder %s75, %s76
      %p85 = scmp.eq.s32.totalorder %s23, 0
      %p86 = por %p84, %p85
      %p87 = scmp.ne.s32.totalorder %s75, %s76
      %p88 = scmp.eq.s32.totalorder %s24, 1
      %p89 = por %p87, %p88
      %p91 = scmp.ne.s32.totalorder %s76, %s90
      %p92 = scmp.eq.s32.totalorder %s24, 0
      %p93 = por %p91, %p92
      %s95 = sadd.s32 %s94, 1
      %p98 = scmp.eq.s32.totalorder %s18, 1
      %p99 = scmp.ne.s32.totalorder %s94, %s96
      %p100 = scmp.eq.s32.totalorder %s18, 0
      %p101 = por %p99, %p100
      %p102 = scmp.ne.s32.totalorder %s94, %s96
      %p103 = scmp.eq.s32.totalorder %s23, 1
      %p104 = por %p102, %p103
      %p105 = scmp.ne.s32.totalorder %s96, %s97
      %p106 = scmp.eq.s32.totalorder %s23, 0
      %p107 = por %p105, %p106
      %p108 = scmp.ne.s32.totalorder %s96, %s97
      %p109 = scmp.eq.s32.totalorder %s24, 1
      %p110 = por %p108, %p109
      %p112 = scmp.ne.s32.totalorder %s97, %s111
      %p113 = scmp.eq.s32.totalorder %s24, 0
      %p114 = por %p112, %p113
      %s115 = ssub.s32 %s18, %s25
      %p116 = scmp.eq.s32.totalorder %s115, 0
      %s118 = sadd.s32 %s117, 1
      %s119 = scalar_select %p116, %s117, %s118
      %p122 = pneg %p116
      %p123 = scmp.eq.s32.totalorder %s18, 1
      %p124 = por %p122, %p123
      %p125 = scmp.ne.s32.totalorder %s117, %s120
      %p126 = scmp.eq.s32.totalorder %s18, 0
      %p127 = por %p125, %p126
      %p128 = scmp.ne.s32.totalorder %s117, %s120
      %p129 = scmp.eq.s32.totalorder %s23, 1
      %p130 = por %p128, %p129
      %p131 = scmp.ne.s32.totalorder %s120, %s121
      %p132 = scmp.eq.s32.totalorder %s23, 0
      %p133 = por %p131, %p132
      %p134 = scmp.ne.s32.totalorder %s120, %s121
      %p135 = scmp.eq.s32.totalorder %s24, 1
      %p136 = por %p134, %p135
      %p138 = scmp.ne.s32.totalorder %s121, %s137
      %p139 = scmp.eq.s32.totalorder %s24, 0
      %p140 = por %p138, %p139
      %p141 = scmp.le.s32.totalorder 1, %s18
      %p142 = scmp.lt.s32.totalorder %s18, 3
      %p143 = pnand %p141, %p142
      %p144 = pneg %p143
      // Predicated region
      $region9: #{tpu_custom_call.1} parent=5 // pred_check
        _
      $region10: #{tpu_custom_call.1} parent=5 // pred_check_branch
        %146 = sbr.rel (%p143) target = $region12
      $region11: #{tpu_custom_call.1} parent=5 // pred_region
        %s147 = ssub.s32 %s18, 1
        // Predicated region
        $region13: #{tpu_custom_call.1} parent=11 // pred_check
          %p148 = pneg %p65
        $region14: #{tpu_custom_call.1} parent=11 // pred_check_branch
          %150 = sbr.rel (%p148) target = $region16
        $region15: #{tpu_custom_call.1} parent=11 // pred_region
          %s152 = ssub.s32 49152, 49152
          %153 = vsyncadd [#allocation7], %s152
          %s154 = sshll.u32 [#allocation6], 4
          %s155 = int_to_ptr.vmem [resolvable:$true] %s154
          %160 = dma.hbm_to_vmem [thread:$0]  %s1, 49152, %s155, [#allocation7], 256, 256, 16
        $region16: #{tpu_custom_call.1} parent=11 // pred_fallthru
          _
        // Predicated region
        $region17: #{tpu_custom_call.1} parent=11 // pred_check
          %p161 = pneg %p86
        $region18: #{tpu_custom_call.1} parent=11 // pred_check_branch
          %163 = sbr.rel (%p161) target = $region20
        $region19: #{tpu_custom_call.1} parent=11 // pred_region
          %s165 = ssub.s32 8192, 8192
          %166 = vsyncadd [#allocation7], %s165
          %s167 = sshll.u32 [#allocation8], 4
          %s168 = int_to_ptr.vmem [resolvable:$true] %s167
          %173 = dma.hbm_to_vmem [thread:$0]  %s2, 8192, %s168, [#allocation7], 256, 256, 16
        $region20: #{tpu_custom_call.1} parent=11 // pred_fallthru
          _
        // Predicated region
        $region21: #{tpu_custom_call.1} parent=11 // pred_check
          %p174 = pneg %p107
        $region22: #{tpu_custom_call.1} parent=11 // pred_check_branch
          %176 = sbr.rel (%p174) target = $region24
        $region23: #{tpu_custom_call.1} parent=11 // pred_region
          %s178 = ssub.s32 256, 256
          %179 = vsyncadd [#allocation10], %s178
          %s181 = sshll.u32 [#allocation9], 4
          %s182 = int_to_ptr.vmem [resolvable:$true] %s181
          %184 = dma.hbm_to_vmem [thread:$0]  %s3, 256, %s182, [#allocation10]
        $region24: #{tpu_custom_call.1} parent=11 // pred_fallthru
          _
      $region12: #{tpu_custom_call.1} parent=5 // pred_fallthru
        _
      %p185 = scmp.lt.s32.totalorder %s18, 2
      // Predicated region
      $region25: #{tpu_custom_call.1} parent=5 // pred_check
        %p186 = pneg %p185
      $region26: #{tpu_custom_call.1} parent=5 // pred_check_branch
        %188 = sbr.rel (%p186) target = $region28
      $region27: #{tpu_custom_call.1} parent=5 // pred_region
        // Predicated region
        $region29: #{tpu_custom_call.1} parent=27 // pred_check
          %p189 = pneg %p38
        $region30: #{tpu_custom_call.1} parent=27 // pred_check_branch
          %191 = sbr.rel (%p189) target = $region32
        $region31: #{tpu_custom_call.1} parent=27 // pred_region
          %s192 = sand.u32 %s28, 1
          %s193 = scalar_lea.sflag [#allocation4], %s192
          %s194 = sand.u32 %s28, 1
          %s195 = smul.addr %s194, 32
          %s196 = scalar_lea.vmem [#allocation3], %s195
          %s198 = ssub.s32 512, 512
          %199 = vsyncadd %s193, %s198
          %s200 = smul.addr %s18, 4
          %s201 = smul.addr %s200, 128
          %s202 = scalar_lea.hbm %s0, %s201
          %s203 = sshll.u32 %s196, 4
          %s204 = int_to_ptr.vmem [resolvable:$true] %s203
          %209 = dma.hbm_to_vmem [thread:$0]  %s202, 512, %s204, %s193, 256, 256, 16
        $region32: #{tpu_custom_call.1} parent=27 // pred_fallthru
          _
      $region28: #{tpu_custom_call.1} parent=5 // pred_fallthru
        _
      %p210 = scmp.le.s32.totalorder 1, %s18
      %p211 = scmp.lt.s32.totalorder %s18, 3
      %p212 = pnand %p210, %p211
      %p213 = pneg %p212
      // Predicated region
      $region33: #{tpu_custom_call.1} parent=5 // pred_check
        _
      $region34: #{tpu_custom_call.1} parent=5 // pred_check_branch
        %215 = sbr.rel (%p212) target = $region36
      $region35: #{tpu_custom_call.1} parent=5 // pred_region
        %s216 = ssub.s32 %s18, 1
        %s217 = sand.u32 %s31, 1
        %s218 = scalar_lea.sflag [#allocation4], %s217
        %s219 = sand.u32 %s31, 1
        %s220 = smul.addr %s219, 32
        %s221 = scalar_lea.vmem [#allocation3], %s220
        // Predicated region
        $region37: #{tpu_custom_call.1} parent=35 // pred_check
          %p222 = pneg %p44
        $region38: #{tpu_custom_call.1} parent=35 // pred_check_branch
          %224 = sbr.rel (%p222) target = $region40
        $region39: #{tpu_custom_call.1} parent=35 // pred_region
          %225 = dma.done %s218, 512
        $region40: #{tpu_custom_call.1} parent=35 // pred_fallthru
          _
        // Predicated region
        $region41: #{tpu_custom_call.1} parent=35 // pred_check
          %p226 = pneg %p65
        $region42: #{tpu_custom_call.1} parent=35 // pred_check_branch
          %228 = sbr.rel (%p226) target = $region44
        $region43: #{tpu_custom_call.1} parent=35 // pred_region
          %229 = dma.done [#allocation7], 49152
        $region44: #{tpu_custom_call.1} parent=35 // pred_fallthru
          _
        // Predicated region
        $region45: #{tpu_custom_call.1} parent=35 // pred_check
          %p230 = pneg %p86
        $region46: #{tpu_custom_call.1} parent=35 // pred_check_branch
          %232 = sbr.rel (%p230) target = $region48
        $region47: #{tpu_custom_call.1} parent=35 // pred_region
          %233 = dma.done [#allocation7], 8192
        $region48: #{tpu_custom_call.1} parent=35 // pred_fallthru
          _
        // Predicated region
        $region49: #{tpu_custom_call.1} parent=35 // pred_check
          %p234 = pneg %p107
        $region50: #{tpu_custom_call.1} parent=35 // pred_check_branch
          %236 = sbr.rel (%p234) target = $region52
        $region51: #{tpu_custom_call.1} parent=35 // pred_region
          %237 = dma.done [#allocation10], 256
        $region52: #{tpu_custom_call.1} parent=35 // pred_fallthru
          _
        %s238 = sand.u32 %s31, 1
        %s239 = scalar_lea.sflag [#allocation4], %s238
        %s240 = sand.u32 %s31, 1
        %s241 = smul.addr %s240, 32
        %s242 = scalar_lea.vmem [#allocation3], %s241
        %p243 = pneg %p44
        %p244 = pneg %p41
        %p245 = pneg %p65
        %p246 = pneg %p62
        %p247 = pneg %p86
        %p248 = pneg %p83
        %p249 = pneg %p107
        %p250 = pneg %p104
        %p251 = pneg %p133
        %p252 = pneg %p130
        %s253 = sand.u32 %s120, 1
        %s254 = scalar_lea.sflag [#allocation5], %s253
        %s255 = sand.u32 %s120, 1
        %s256 = smul.addr %s255, 32
        %s257 = scalar_lea.vmem [#allocation11], %s256
        %v258 = vld [vmem:[#allocation8] sm:$0xff]
        %v259 = vld [vmem:[#allocation8 + $0x8] sm:$0xff]
        %v260 = vld [vmem:[#allocation8 + $0x10] sm:$0xff]
        %v261 = vld [vmem:[#allocation8 + $0x18] sm:$0xff]
        %v262 = vld [vmem:[#allocation8 + $0x20] sm:$0xff]
        %v263 = vld [vmem:[#allocation8 + $0x28] sm:$0xff]
        %v264 = vld [vmem:[#allocation8 + $0x30] sm:$0xff]
        %v265 = vld [vmem:[#allocation8 + $0x38] sm:$0xff]
        %v266 = vld [vmem:[#allocation8 + $0x40] sm:$0xff]
        %v267 = vld [vmem:[#allocation8 + $0x48] sm:$0xff]
        %v268 = vld [vmem:[#allocation8 + $0x50] sm:$0xff]
        %v269 = vld [vmem:[#allocation8 + $0x58] sm:$0xff]
        %v270 = vld [vmem:[#allocation8 + $0x60] sm:$0xff]
        %v271 = vld [vmem:[#allocation8 + $0x68] sm:$0xff]
        %v272 = vld [vmem:[#allocation8 + $0x70] sm:$0xff]
        %v273 = vld [vmem:[#allocation8 + $0x78] sm:$0xff]
        %v274 = vld [vmem:[#allocation8 + $0x80] sm:$0xff]
        %v275 = vld [vmem:[#allocation8 + $0x88] sm:$0xff]
        %v276 = vld [vmem:[#allocation8 + $0x90] sm:$0xff]
        %v277 = vld [vmem:[#allocation8 + $0x98] sm:$0xff]
        %v278 = vld [vmem:[#allocation8 + $0xa0] sm:$0xff]
        %v279 = vld [vmem:[#allocation8 + $0xa8] sm:$0xff]
        %v280 = vld [vmem:[#allocation8 + $0xb0] sm:$0xff]
        %v281 = vld [vmem:[#allocation8 + $0xb8] sm:$0xff]
        %v282 = vld [vmem:[#allocation8 + $0xc0] sm:$0xff]
        %v283 = vld [vmem:[#allocation8 + $0xc8] sm:$0xff]
        %v284 = vld [vmem:[#allocation8 + $0xd0] sm:$0xff]
        %v285 = vld [vmem:[#allocation8 + $0xd8] sm:$0xff]
        %v286 = vld [vmem:[#allocation8 + $0xe0] sm:$0xff]
        %v287 = vld [vmem:[#allocation8 + $0xe8] sm:$0xff]
        %v288 = vld [vmem:[#allocation8 + $0xf0] sm:$0xff]
        %v289 = vld [vmem:[#allocation8 + $0xf8] sm:$0xff]
        %v290 = vld [vmem:[#allocation8 + $0x100] sm:$0xff]
        %v291 = vld [vmem:[#allocation8 + $0x108] sm:$0xff]
        %v292 = vld [vmem:[#allocation8 + $0x110] sm:$0xff]
        %v293 = vld [vmem:[#allocation8 + $0x118] sm:$0xff]
        %v294 = vld [vmem:[#allocation8 + $0x120] sm:$0xff]
        %v295 = vld [vmem:[#allocation8 + $0x128] sm:$0xff]
        %v296 = vld [vmem:[#allocation8 + $0x130] sm:$0xff]
        %v297 = vld [vmem:[#allocation8 + $0x138] sm:$0xff]
        %v298 = vld [vmem:[#allocation8 + $0x140] sm:$0xff]
        %v299 = vld [vmem:[#allocation8 + $0x148] sm:$0xff]
        %v300 = vld [vmem:[#allocation8 + $0x150] sm:$0xff]
        %v301 = vld [vmem:[#allocation8 + $0x158] sm:$0xff]
        %v302 = vld [vmem:[#allocation8 + $0x160] sm:$0xff]
        %v303 = vld [vmem:[#allocation8 + $0x168] sm:$0xff]
        %v304 = vld [vmem:[#allocation8 + $0x170] sm:$0xff]
        %v305 = vld [vmem:[#allocation8 + $0x178] sm:$0xff]
        %v306 = vld [vmem:[#allocation8 + $0x180] sm:$0xff]
        %v307 = vld [vmem:[#allocation8 + $0x188] sm:$0xff]
        %v308 = vld [vmem:[#allocation8 + $0x190] sm:$0xff]
        %v309 = vld [vmem:[#allocation8 + $0x198] sm:$0xff]
        %v310 = vld [vmem:[#allocation8 + $0x1a0] sm:$0xff]
        %v311 = vld [vmem:[#allocation8 + $0x1a8] sm:$0xff]
        %v312 = vld [vmem:[#allocation8 + $0x1b0] sm:$0xff]
        %v313 = vld [vmem:[#allocation8 + $0x1b8] sm:$0xff]
        %v314 = vld [vmem:[#allocation8 + $0x1c0] sm:$0xff]
        %v315 = vld [vmem:[#allocation8 + $0x1c8] sm:$0xff]
        %v316 = vld [vmem:[#allocation8 + $0x1d0] sm:$0xff]
        %v317 = vld [vmem:[#allocation8 + $0x1d8] sm:$0xff]
        %v318 = vld [vmem:[#allocation8 + $0x1e0] sm:$0xff]
        %v319 = vld [vmem:[#allocation8 + $0x1e8] sm:$0xff]
        %v320 = vld [vmem:[#allocation8 + $0x1f0] sm:$0xff]
        %v321 = vld [vmem:[#allocation8 + $0x1f8] sm:$0xff]
        %v322 = vlaneseq
        %vm323 = vcmp.ge.s32.totalorder %v322, 0
        %vm324 = vcmp.lt.s32.totalorder %v322, 256
        %vm325 = vmand %vm323, %vm324
        %326 = vst.msk [vmem:[#allocation2] ss:$8 sm:$0x3] %vm325, 0.0
        %327 = vst.msk [vmem:[#allocation2] ss:$8 sm:$0x0] %vm325, 0.0
        %s328 = scalar_lea.vmem [#allocation2], 33
        %329 = vst.msk [vmem:[%s328] ss:$8 sm:$0x3] %vm325, 0.0
        %330 = vst.msk [vmem:[%s328] ss:$8 sm:$0x0] %vm325, 0.0
        %v331 = vld [vmem:[%s221] sm:$0xff]
        %v332 = vld [vmem:[%s221 + $0x8] sm:$0xff]
        %v333 = vld [vmem:[%s221 + $0x10] sm:$0xff]
        %v334 = vld [vmem:[%s221 + $0x18] sm:$0xff]
        %v335 = vld [vmem:[#allocation6] sm:$0xff]
        %v336 = vld [vmem:[#allocation6 + $0x8] sm:$0xff]
        %v337 = vld [vmem:[#allocation6 + $0x10] sm:$0xff]
        %v338 = vld [vmem:[#allocation6 + $0x18] sm:$0xff]
        %v339 = vld [vmem:[#allocation6 + $0x20] sm:$0xff]
        %v340 = vld [vmem:[#allocation6 + $0x28] sm:$0xff]
        %v341 = vld [vmem:[#allocation6 + $0x30] sm:$0xff]
        %v342 = vld [vmem:[#allocation6 + $0x38] sm:$0xff]
        %v343 = vld [vmem:[#allocation6 + $0x40] sm:$0xff]
        %v344 = vld [vmem:[#allocation6 + $0x48] sm:$0xff]
        %v345 = vld [vmem:[#allocation6 + $0x50] sm:$0xff]
        %v346 = vld [vmem:[#allocation6 + $0x58] sm:$0xff]
        %v347 = vld [vmem:[#allocation6 + $0x60] sm:$0xff]
        %v348 = vld [vmem:[#allocation6 + $0x68] sm:$0xff]
        %v349 = vld [vmem:[#allocation6 + $0x70] sm:$0xff]
        %v350 = vld [vmem:[#allocation6 + $0x78] sm:$0xff]
        %v351 = vld [vmem:[#allocation6 + $0x80] sm:$0xff]
        %v352 = vld [vmem:[#allocation6 + $0x88] sm:$0xff]
        %v353 = vld [vmem:[#allocation6 + $0x90] sm:$0xff]
        %v354 = vld [vmem:[#allocation6 + $0x98] sm:$0xff]
        %v355 = vld [vmem:[#allocation6 + $0xa0] sm:$0xff]
        %v356 = vld [vmem:[#allocation6 + $0xa8] sm:$0xff]
        %v357 = vld [vmem:[#allocation6 + $0xb0] sm:$0xff]
        %v358 = vld [vmem:[#allocation6 + $0xb8] sm:$0xff]
        %v359 = vld [vmem:[#allocation6 + $0xc0] sm:$0xff]
        %v360 = vld [vmem:[#allocation6 + $0xc8] sm:$0xff]
        %v361 = vld [vmem:[#allocation6 + $0xd0] sm:$0xff]
        %v362 = vld [vmem:[#allocation6 + $0xd8] sm:$0xff]
        %v363 = vld [vmem:[#allocation6 + $0xe0] sm:$0xff]
        %v364 = vld [vmem:[#allocation6 + $0xe8] sm:$0xff]
        %v365 = vld [vmem:[#allocation6 + $0xf0] sm:$0xff]
        %v366 = vld [vmem:[#allocation6 + $0xf8] sm:$0xff]
        %v367 = vld [vmem:[#allocation6 + $0x100] sm:$0xff]
        %v368 = vld [vmem:[#allocation6 + $0x108] sm:$0xff]
        %v369 = vld [vmem:[#allocation6 + $0x110] sm:$0xff]
        %v370 = vld [vmem:[#allocation6 + $0x118] sm:$0xff]
        %v371 = vld [vmem:[#allocation6 + $0x120] sm:$0xff]
        %v372 = vld [vmem:[#allocation6 + $0x128] sm:$0xff]
        %v373 = vld [vmem:[#allocation6 + $0x130] sm:$0xff]
        %v374 = vld [vmem:[#allocation6 + $0x138] sm:$0xff]
        %v375 = vld [vmem:[#allocation6 + $0x140] sm:$0xff]
        %v376 = vld [vmem:[#allocation6 + $0x148] sm:$0xff]
        %v377 = vld [vmem:[#allocation6 + $0x150] sm:$0xff]
        %v378 = vld [vmem:[#allocation6 + $0x158] sm:$0xff]
        %v379 = vld [vmem:[#allocation6 + $0x160] sm:$0xff]
        %v380 = vld [vmem:[#allocation6 + $0x168] sm:$0xff]
        %v381 = vld [vmem:[#allocation6 + $0x170] sm:$0xff]
        %v382 = vld [vmem:[#allocation6 + $0x178] sm:$0xff]
        %v383 = vld [vmem:[#allocation6 + $0x180] sm:$0xff]
        %v384 = vld [vmem:[#allocation6 + $0x188] sm:$0xff]
        %v385 = vld [vmem:[#allocation6 + $0x190] sm:$0xff]
        %v386 = vld [vmem:[#allocation6 + $0x198] sm:$0xff]
        %v387 = vld [vmem:[#allocation6 + $0x1a0] sm:$0xff]
        %v388 = vld [vmem:[#allocation6 + $0x1a8] sm:$0xff]
        %v389 = vld [vmem:[#allocation6 + $0x1b0] sm:$0xff]
        %v390 = vld [vmem:[#allocation6 + $0x1b8] sm:$0xff]
        %v391 = vld [vmem:[#allocation6 + $0x1c0] sm:$0xff]
        %v392 = vld [vmem:[#allocation6 + $0x1c8] sm:$0xff]
        %v393 = vld [vmem:[#allocation6 + $0x1d0] sm:$0xff]
        %v394 = vld [vmem:[#allocation6 + $0x1d8] sm:$0xff]
        %v395 = vld [vmem:[#allocation6 + $0x1e0] sm:$0xff]
        %v396 = vld [vmem:[#allocation6 + $0x1e8] sm:$0xff]
        %v397 = vld [vmem:[#allocation6 + $0x1f0] sm:$0xff]
        %v398 = vld [vmem:[#allocation6 + $0x1f8] sm:$0xff]
        %v399 = vld [vmem:[#allocation6 + $0x200] sm:$0xff]
        %v400 = vld [vmem:[#allocation6 + $0x208] sm:$0xff]
        %v401 = vld [vmem:[#allocation6 + $0x210] sm:$0xff]
        %v402 = vld [vmem:[#allocation6 + $0x218] sm:$0xff]
        %v403 = vld [vmem:[#allocation6 + $0x220] sm:$0xff]
        %v404 = vld [vmem:[#allocation6 + $0x228] sm:$0xff]
        %v405 = vld [vmem:[#allocation6 + $0x230] sm:$0xff]
        %v406 = vld [vmem:[#allocation6 + $0x238] sm:$0xff]
        %v407 = vld [vmem:[#allocation6 + $0x240] sm:$0xff]
        %v408 = vld [vmem:[#allocation6 + $0x248] sm:$0xff]
        %v409 = vld [vmem:[#allocation6 + $0x250] sm:$0xff]
        %v410 = vld [vmem:[#allocation6 + $0x258] sm:$0xff]
        %v411 = vld [vmem:[#allocation6 + $0x260] sm:$0xff]
        %v412 = vld [vmem:[#allocation6 + $0x268] sm:$0xff]
        %v413 = vld [vmem:[#allocation6 + $0x270] sm:$0xff]
        %v414 = vld [vmem:[#allocation6 + $0x278] sm:$0xff]
        %v415 = vld [vmem:[#allocation6 + $0x280] sm:$0xff]
        %v416 = vld [vmem:[#allocation6 + $0x288] sm:$0xff]
        %v417 = vld [vmem:[#allocation6 + $0x290] sm:$0xff]
        %v418 = vld [vmem:[#allocation6 + $0x298] sm:$0xff]
        %v419 = vld [vmem:[#allocation6 + $0x2a0] sm:$0xff]
        %v420 = vld [vmem:[#allocation6 + $0x2a8] sm:$0xff]
        %v421 = vld [vmem:[#allocation6 + $0x2b0] sm:$0xff]
        %v422 = vld [vmem:[#allocation6 + $0x2b8] sm:$0xff]
        %v423 = vld [vmem:[#allocation6 + $0x2c0] sm:$0xff]
        %v424 = vld [vmem:[#allocation6 + $0x2c8] sm:$0xff]
        %v425 = vld [vmem:[#allocation6 + $0x2d0] sm:$0xff]
        %v426 = vld [vmem:[#allocation6 + $0x2d8] sm:$0xff]
        %v427 = vld [vmem:[#allocation6 + $0x2e0] sm:$0xff]
        %v428 = vld [vmem:[#allocation6 + $0x2e8] sm:$0xff]
        %v429 = vld [vmem:[#allocation6 + $0x2f0] sm:$0xff]
        %v430 = vld [vmem:[#allocation6 + $0x2f8] sm:$0xff]
        %v431 = vld [vmem:[#allocation6 + $0x300] sm:$0xff]
        %v432 = vld [vmem:[#allocation6 + $0x308] sm:$0xff]
        %v433 = vld [vmem:[#allocation6 + $0x310] sm:$0xff]
        %v434 = vld [vmem:[#allocation6 + $0x318] sm:$0xff]
        %v435 = vld [vmem:[#allocation6 + $0x320] sm:$0xff]
        %v436 = vld [vmem:[#allocation6 + $0x328] sm:$0xff]
        %v437 = vld [vmem:[#allocation6 + $0x330] sm:$0xff]
        %v438 = vld [vmem:[#allocation6 + $0x338] sm:$0xff]
        %v439 = vld [vmem:[#allocation6 + $0x340] sm:$0xff]
        %v440 = vld [vmem:[#allocation6 + $0x348] sm:$0xff]
        %v441 = vld [vmem:[#allocation6 + $0x350] sm:$0xff]
        %v442 = vld [vmem:[#allocation6 + $0x358] sm:$0xff]
        %v443 = vld [vmem:[#allocation6 + $0x360] sm:$0xff]
        %v444 = vld [vmem:[#allocation6 + $0x368] sm:$0xff]
        %v445 = vld [vmem:[#allocation6 + $0x370] sm:$0xff]
        %v446 = vld [vmem:[#allocation6 + $0x378] sm:$0xff]
        %v447 = vld [vmem:[#allocation6 + $0x380] sm:$0xff]
        %v448 = vld [vmem:[#allocation6 + $0x388] sm:$0xff]
        %v449 = vld [vmem:[#allocation6 + $0x390] sm:$0xff]
        %v450 = vld [vmem:[#allocation6 + $0x398] sm:$0xff]
        %v451 = vld [vmem:[#allocation6 + $0x3a0] sm:$0xff]
        %v452 = vld [vmem:[#allocation6 + $0x3a8] sm:$0xff]
        %v453 = vld [vmem:[#allocation6 + $0x3b0] sm:$0xff]
        %v454 = vld [vmem:[#allocation6 + $0x3b8] sm:$0xff]
        %v455 = vld [vmem:[#allocation6 + $0x3c0] sm:$0xff]
        %v456 = vld [vmem:[#allocation6 + $0x3c8] sm:$0xff]
        %v457 = vld [vmem:[#allocation6 + $0x3d0] sm:$0xff]
        %v458 = vld [vmem:[#allocation6 + $0x3d8] sm:$0xff]
        %v459 = vld [vmem:[#allocation6 + $0x3e0] sm:$0xff]
        %v460 = vld [vmem:[#allocation6 + $0x3e8] sm:$0xff]
        %v461 = vld [vmem:[#allocation6 + $0x3f0] sm:$0xff]
        %v462 = vld [vmem:[#allocation6 + $0x3f8] sm:$0xff]
        %v463 = vld [vmem:[#allocation6 + $0x400] sm:$0xff]
        %v464 = vld [vmem:[#allocation6 + $0x408] sm:$0xff]
        %v465 = vld [vmem:[#allocation6 + $0x410] sm:$0xff]
        %v466 = vld [vmem:[#allocation6 + $0x418] sm:$0xff]
        %v467 = vld [vmem:[#allocation6 + $0x420] sm:$0xff]
        %v468 = vld [vmem:[#allocation6 + $0x428] sm:$0xff]
        %v469 = vld [vmem:[#allocation6 + $0x430] sm:$0xff]
        %v470 = vld [vmem:[#allocation6 + $0x438] sm:$0xff]
        %v471 = vld [vmem:[#allocation6 + $0x440] sm:$0xff]
        %v472 = vld [vmem:[#allocation6 + $0x448] sm:$0xff]
        %v473 = vld [vmem:[#allocation6 + $0x450] sm:$0xff]
        %v474 = vld [vmem:[#allocation6 + $0x458] sm:$0xff]
        %v475 = vld [vmem:[#allocation6 + $0x460] sm:$0xff]
        %v476 = vld [vmem:[#allocation6 + $0x468] sm:$0xff]
        %v477 = vld [vmem:[#allocation6 + $0x470] sm:$0xff]
        %v478 = vld [vmem:[#allocation6 + $0x478] sm:$0xff]
        %v479 = vld [vmem:[#allocation6 + $0x480] sm:$0xff]
        %v480 = vld [vmem:[#allocation6 + $0x488] sm:$0xff]
        %v481 = vld [vmem:[#allocation6 + $0x490] sm:$0xff]
        %v482 = vld [vmem:[#allocation6 + $0x498] sm:$0xff]
        %v483 = vld [vmem:[#allocation6 + $0x4a0] sm:$0xff]
        %v484 = vld [vmem:[#allocation6 + $0x4a8] sm:$0xff]
        %v485 = vld [vmem:[#allocation6 + $0x4b0] sm:$0xff]
        %v486 = vld [vmem:[#allocation6 + $0x4b8] sm:$0xff]
        %v487 = vld [vmem:[#allocation6 + $0x4c0] sm:$0xff]
        %v488 = vld [vmem:[#allocation6 + $0x4c8] sm:$0xff]
        %v489 = vld [vmem:[#allocation6 + $0x4d0] sm:$0xff]
        %v490 = vld [vmem:[#allocation6 + $0x4d8] sm:$0xff]
        %v491 = vld [vmem:[#allocation6 + $0x4e0] sm:$0xff]
        %v492 = vld [vmem:[#allocation6 + $0x4e8] sm:$0xff]
        %v493 = vld [vmem:[#allocation6 + $0x4f0] sm:$0xff]
        %v494 = vld [vmem:[#allocation6 + $0x4f8] sm:$0xff]
        %v495 = vld [vmem:[#allocation6 + $0x500] sm:$0xff]
        %v496 = vld [vmem:[#allocation6 + $0x508] sm:$0xff]
        %v497 = vld [vmem:[#allocation6 + $0x510] sm:$0xff]
        %v498 = vld [vmem:[#allocation6 + $0x518] sm:$0xff]
        %v499 = vld [vmem:[#allocation6 + $0x520] sm:$0xff]
        %v500 = vld [vmem:[#allocation6 + $0x528] sm:$0xff]
        %v501 = vld [vmem:[#allocation6 + $0x530] sm:$0xff]
        %v502 = vld [vmem:[#allocation6 + $0x538] sm:$0xff]
        %v503 = vld [vmem:[#allocation6 + $0x540] sm:$0xff]
        %v504 = vld [vmem:[#allocation6 + $0x548] sm:$0xff]
        %v505 = vld [vmem:[#allocation6 + $0x550] sm:$0xff]
        %v506 = vld [vmem:[#allocation6 + $0x558] sm:$0xff]
        %v507 = vld [vmem:[#allocation6 + $0x560] sm:$0xff]
        %v508 = vld [vmem:[#allocation6 + $0x568] sm:$0xff]
        %v509 = vld [vmem:[#allocation6 + $0x570] sm:$0xff]
        %v510 = vld [vmem:[#allocation6 + $0x578] sm:$0xff]
        %v511 = vld [vmem:[#allocation6 + $0x580] sm:$0xff]
        %v512 = vld [vmem:[#allocation6 + $0x588] sm:$0xff]
        %v513 = vld [vmem:[#allocation6 + $0x590] sm:$0xff]
        %v514 = vld [vmem:[#allocation6 + $0x598] sm:$0xff]
        %v515 = vld [vmem:[#allocation6 + $0x5a0] sm:$0xff]
        %v516 = vld [vmem:[#allocation6 + $0x5a8] sm:$0xff]
        %v517 = vld [vmem:[#allocation6 + $0x5b0] sm:$0xff]
        %v518 = vld [vmem:[#allocation6 + $0x5b8] sm:$0xff]
        %v519 = vld [vmem:[#allocation6 + $0x5c0] sm:$0xff]
        %v520 = vld [vmem:[#allocation6 + $0x5c8] sm:$0xff]
        %v521 = vld [vmem:[#allocation6 + $0x5d0] sm:$0xff]
        %v522 = vld [vmem:[#allocation6 + $0x5d8] sm:$0xff]
        %v523 = vld [vmem:[#allocation6 + $0x5e0] sm:$0xff]
        %v524 = vld [vmem:[#allocation6 + $0x5e8] sm:$0xff]
        %v525 = vld [vmem:[#allocation6 + $0x5f0] sm:$0xff]
        %v526 = vld [vmem:[#allocation6 + $0x5f8] sm:$0xff]
        %v527 = vld [vmem:[#allocation9] ss:$8 sm:$0x3]
        %s528 = scalar_lea.vmem [#allocation9], 1
        %v529 = vld [vmem:[%s528] ss:$8 sm:$0x3]
        %s530 = scalar_lea.vmem [#allocation9], 2
        %v531 = vld [vmem:[%s530] ss:$8 sm:$0x3]
        %vm536 = vcmask 1040384
        %v537 = vrot.slane %v331, 7
        %v538 = vrot.slane %v332, 7
        %v539 = vrot.slane %v333, 7
        %v540 = vsel %vm536, %v537, %v539
        %v541 = vrot.slane %v334, 7
        %v542 = vsel %vm536, %v538, %v541
        %549 = vst [vmem:[#allocation2] sm:$0xfe] %v537
        %550 = vst [vmem:[#allocation2 + $0x8] sm:$0xfe] %v538
        %551 = vst [vmem:[#allocation2 + $0x10] sm:$0xff] %v540
        %552 = vst [vmem:[#allocation2 + $0x18] sm:$0xff] %v542
        %553 = vst [vmem:[#allocation2 + $0x20] sm:$0x1] %v539
        %554 = vst [vmem:[#allocation2 + $0x28] sm:$0x1] %v541
        %v555 = vld [vmem:[#allocation2] sm:$0xff]
        %v556 = vld [vmem:[#allocation2 + $0x8] sm:$0xff]
        %v557 = vld [vmem:[#allocation2 + $0x10] sm:$0xff]
        %v558 = vld [vmem:[#allocation2 + $0x18] sm:$0xff]
        %v559 = vld [vmem:[#allocation2] sm:$0xfc]
        %v560 = vld [vmem:[#allocation2 + $0x8] sm:$0xfc]
        %v561 = vld [vmem:[#allocation2 + $0x20] sm:$0x3]
        %v562 = vld [vmem:[#allocation2 + $0x28] sm:$0x3]
        %vm569 = vcmask 1045504
        %v570 = vrot.slane %v559, 2
        %v571 = vrot.slane %v557, 2
        %v572 = vsel %vm569, %v570, %v571
        %v573 = vrot.slane %v560, 2
        %v574 = vrot.slane %v558, 2
        %v575 = vsel %vm569, %v573, %v574
        %v576 = vrot.slane %v561, 2
        %v577 = vsel %vm569, %v571, %v576
        %v578 = vrot.slane %v562, 2
        %v579 = vsel %vm569, %v574, %v578
        %v585 = vlaneseq
        %v586 = vshrl.u32 %v585, 7
        %v587 = vsub.s32 0, %v586
        %v588 = vrot.slane %v527, %v587
        %v589 = vlaneseq
        %v590 = vshrl.u32 %v589, 7
        %v591 = vsub.s32 1, %v590
        %v592 = vrot.slane %v527, %v591
        %595 = vmatprep.subr.mxu0 %v336
        %596 = vmatpush1.msra.mxu0 %v335
        %597 = vmatprep.subr.mxu0 %v338
        %598 = vmatpush1.msra.mxu0 %v337
        %599 = vmatprep.subr.mxu0 %v340
        %600 = vmatpush1.msra.mxu0 %v339
        %601 = vmatprep.subr.mxu0 %v342
        %602 = vmatpush1.msra.mxu0 %v341
        %603 = vmatprep.subr.mxu0 %v344
        %604 = vmatpush1.msra.mxu0 %v343
        %605 = vmatprep.subr.mxu0 %v346
        %606 = vmatpush1.msra.mxu0 %v345
        %607 = vmatprep.subr.mxu0 %v348
        %608 = vmatpush1.msra.mxu0 %v347
        %609 = vmatprep.subr.mxu0 %v350
        %610 = vmatpush1.msra.mxu0 %v349
        %611 = vmatprep.subr.mxu0 %v352
        %612 = vmatpush1.msra.mxu0 %v351
        %613 = vmatprep.subr.mxu0 %v354
        %614 = vmatpush1.msra.mxu0 %v353
        %615 = vmatprep.subr.mxu0 %v356
        %616 = vmatpush1.msra.mxu0 %v355
        %617 = vmatprep.subr.mxu0 %v358
        %618 = vmatpush1.msra.mxu0 %v357
        %619 = vmatprep.subr.mxu0 %v360
        %620 = vmatpush1.msra.mxu0 %v359
        %621 = vmatprep.subr.mxu0 %v362
        %622 = vmatpush1.msra.mxu0 %v361
        %623 = vmatprep.subr.mxu0 %v364
        %624 = vmatpush1.msra.mxu0 %v363
        %625 = vmatprep.subr.mxu0 %v366
        %626 = vmatpush1.msra.mxu0 %v365
        %627 = vmatprep.subr.mxu0 %v368
        %628 = vmatpush1.msra.mxu0 %v367
        %629 = vmatprep.subr.mxu0 %v370
        %630 = vmatpush1.msra.mxu0 %v369
        %631 = vmatprep.subr.mxu0 %v372
        %632 = vmatpush1.msra.mxu0 %v371
        %633 = vmatprep.subr.mxu0 %v374
        %634 = vmatpush1.msra.mxu0 %v373
        %635 = vmatprep.subr.mxu0 %v376
        %636 = vmatpush1.msra.mxu0 %v375
        %637 = vmatprep.subr.mxu0 %v378
        %638 = vmatpush1.msra.mxu0 %v377
        %639 = vmatprep.subr.mxu0 %v380
        %640 = vmatpush1.msra.mxu0 %v379
        %641 = vmatprep.subr.mxu0 %v382
        %642 = vmatpush1.msra.mxu0 %v381
        %643 = vmatprep.subr.mxu0 %v384
        %644 = vmatpush1.msra.mxu0 %v383
        %645 = vmatprep.subr.mxu0 %v386
        %646 = vmatpush1.msra.mxu0 %v385
        %647 = vmatprep.subr.mxu0 %v388
        %648 = vmatpush1.msra.mxu0 %v387
        %649 = vmatprep.subr.mxu0 %v390
        %650 = vmatpush1.msra.mxu0 %v389
        %651 = vmatprep.subr.mxu0 %v392
        %652 = vmatpush1.msra.mxu0 %v391
        %653 = vmatprep.subr.mxu0 %v394
        %654 = vmatpush1.msra.mxu0 %v393
        %655 = vmatprep.subr.mxu0 %v396
        %656 = vmatpush1.msra.mxu0 %v395
        %657 = vmatprep.subr.mxu0 %v398
        %658 = vmatpush1.msra.mxu0 %v397
        %659 = vmatprep.mubr.f32.mxu0 %v556
        %660 = vmatmul.mubr.f32.gmra.mrb[0].mxu0 %v555
        %v661 = vpop.f32.mrb[0].mxu0
        %v662 = vadd.f32 %v588, %v661
        %v663 = vpop.f32.mrb[0].mxu0
        %v664 = vadd.f32 %v592, %v663
        %665 = vmatprep.mubr.f32.mxu0 %v558
        %666 = vmatmul.mubr.f32.gmra.mrb[0].mxu0 %v557
        %v667 = vpop.f32.mrb[0].mxu0
        %v668 = vadd.f32 %v588, %v667
        %v669 = vpop.f32.mrb[0].mxu0
        %v670 = vadd.f32 %v592, %v669
        %671 = vdwg.mxu0
        %672 = vmatprep.subr.mxu0 %v400
        %673 = vmatpush1.msra.mxu0 %v399
        %674 = vmatprep.subr.mxu0 %v402
        %675 = vmatpush1.msra.mxu0 %v401
        %676 = vmatprep.subr.mxu0 %v404
        %677 = vmatpush1.msra.mxu0 %v403
        %678 = vmatprep.subr.mxu0 %v406
        %679 = vmatpush1.msra.mxu0 %v405
        %680 = vmatprep.subr.mxu0 %v408
        %681 = vmatpush1.msra.mxu0 %v407
        %682 = vmatprep.subr.mxu0 %v410
        %683 = vmatpush1.msra.mxu0 %v409
        %684 = vmatprep.subr.mxu0 %v412
        %685 = vmatpush1.msra.mxu0 %v411
        %686 = vmatprep.subr.mxu0 %v414
        %687 = vmatpush1.msra.mxu0 %v413
        %688 = vmatprep.subr.mxu0 %v416
        %689 = vmatpush1.msra.mxu0 %v415
        %690 = vmatprep.subr.mxu0 %v418
        %691 = vmatpush1.msra.mxu0 %v417
        %692 = vmatprep.subr.mxu0 %v420
        %693 = vmatpush1.msra.mxu0 %v419
        %694 = vmatprep.subr.mxu0 %v422
        %695 = vmatpush1.msra.mxu0 %v421
        %696 = vmatprep.subr.mxu0 %v424
        %697 = vmatpush1.msra.mxu0 %v423
        %698 = vmatprep.subr.mxu0 %v426
        %699 = vmatpush1.msra.mxu0 %v425
        %700 = vmatprep.subr.mxu0 %v428
        %701 = vmatpush1.msra.mxu0 %v427
        %702 = vmatprep.subr.mxu0 %v430
        %703 = vmatpush1.msra.mxu0 %v429
        %704 = vmatprep.subr.mxu0 %v432
        %705 = vmatpush1.msra.mxu0 %v431
        %706 = vmatprep.subr.mxu0 %v434
        %707 = vmatpush1.msra.mxu0 %v433
        %708 = vmatprep.subr.mxu0 %v436
        %709 = vmatpush1.msra.mxu0 %v435
        %710 = vmatprep.subr.mxu0 %v438
        %711 = vmatpush1.msra.mxu0 %v437
        %712 = vmatprep.subr.mxu0 %v440
        %713 = vmatpush1.msra.mxu0 %v439
        %714 = vmatprep.subr.mxu0 %v442
        %715 = vmatpush1.msra.mxu0 %v441
        %716 = vmatprep.subr.mxu0 %v444
        %717 = vmatpush1.msra.mxu0 %v443
        %718 = vmatprep.subr.mxu0 %v446
        %719 = vmatpush1.msra.mxu0 %v445
        %720 = vmatprep.subr.mxu0 %v448
        %721 = vmatpush1.msra.mxu0 %v447
        %722 = vmatprep.subr.mxu0 %v450
        %723 = vmatpush1.msra.mxu0 %v449
        %724 = vmatprep.subr.mxu0 %v452
        %725 = vmatpush1.msra.mxu0 %v451
        %726 = vmatprep.subr.mxu0 %v454
        %727 = vmatpush1.msra.mxu0 %v453
        %728 = vmatprep.subr.mxu0 %v456
        %729 = vmatpush1.msra.mxu0 %v455
        %730 = vmatprep.subr.mxu0 %v458
        %731 = vmatpush1.msra.mxu0 %v457
        %732 = vmatprep.subr.mxu0 %v460
        %733 = vmatpush1.msra.mxu0 %v459
        %734 = vmatprep.subr.mxu0 %v462
        %735 = vmatpush1.msra.mxu0 %v461
        %736 = vmatprep.mubr.f32.mxu0 %v332
        %737 = vmatmul.mubr.f32.gmra.mrb[0].mxu0 %v331
        %v738 = vpop.f32.mrb[0].mxu0
        %v739 = vadd.f32 %v662, %v738
        %v740 = vpop.f32.mrb[0].mxu0
        %v741 = vadd.f32 %v664, %v740
        %742 = vmatprep.mubr.f32.mxu0 %v334
        %743 = vmatmul.mubr.f32.gmra.mrb[0].mxu0 %v333
        %v744 = vpop.f32.mrb[0].mxu0
        %v745 = vadd.f32 %v668, %v744
        %v746 = vpop.f32.mrb[0].mxu0
        %v747 = vadd.f32 %v670, %v746
        %748 = vdwg.mxu0
        %749 = vmatprep.subr.mxu0 %v464
        %750 = vmatpush1.msra.mxu0 %v463
        %751 = vmatprep.subr.mxu0 %v466
        %752 = vmatpush1.msra.mxu0 %v465
        %753 = vmatprep.subr.mxu0 %v468
        %754 = vmatpush1.msra.mxu0 %v467
        %755 = vmatprep.subr.mxu0 %v470
        %756 = vmatpush1.msra.mxu0 %v469
        %757 = vmatprep.subr.mxu0 %v472
        %758 = vmatpush1.msra.mxu0 %v471
        %759 = vmatprep.subr.mxu0 %v474
        %760 = vmatpush1.msra.mxu0 %v473
        %761 = vmatprep.subr.mxu0 %v476
        %762 = vmatpush1.msra.mxu0 %v475
        %763 = vmatprep.subr.mxu0 %v478
        %764 = vmatpush1.msra.mxu0 %v477
        %765 = vmatprep.subr.mxu0 %v480
        %766 = vmatpush1.msra.mxu0 %v479
        %767 = vmatprep.subr.mxu0 %v482
        %768 = vmatpush1.msra.mxu0 %v481
        %769 = vmatprep.subr.mxu0 %v484
        %770 = vmatpush1.msra.mxu0 %v483
        %771 = vmatprep.subr.mxu0 %v486
        %772 = vmatpush1.msra.mxu0 %v485
        %773 = vmatprep.subr.mxu0 %v488
        %774 = vmatpush1.msra.mxu0 %v487
        %775 = vmatprep.subr.mxu0 %v490
        %776 = vmatpush1.msra.mxu0 %v489
        %777 = vmatprep.subr.mxu0 %v492
        %778 = vmatpush1.msra.mxu0 %v491
        %779 = vmatprep.subr.mxu0 %v494
        %780 = vmatpush1.msra.mxu0 %v493
        %781 = vmatprep.subr.mxu0 %v496
        %782 = vmatpush1.msra.mxu0 %v495
        %783 = vmatprep.subr.mxu0 %v498
        %784 = vmatpush1.msra.mxu0 %v497
        %785 = vmatprep.subr.mxu0 %v500
        %786 = vmatpush1.msra.mxu0 %v499
        %787 = vmatprep.subr.mxu0 %v502
        %788 = vmatpush1.msra.mxu0 %v501
        %789 = vmatprep.subr.mxu0 %v504
        %790 = vmatpush1.msra.mxu0 %v503
        %791 = vmatprep.subr.mxu0 %v506
        %792 = vmatpush1.msra.mxu0 %v505
        %793 = vmatprep.subr.mxu0 %v508
        %794 = vmatpush1.msra.mxu0 %v507
        %795 = vmatprep.subr.mxu0 %v510
        %796 = vmatpush1.msra.mxu0 %v509
        %797 = vmatprep.subr.mxu0 %v512
        %798 = vmatpush1.msra.mxu0 %v511
        %799 = vmatprep.subr.mxu0 %v514
        %800 = vmatpush1.msra.mxu0 %v513
        %801 = vmatprep.subr.mxu0 %v516
        %802 = vmatpush1.msra.mxu0 %v515
        %803 = vmatprep.subr.mxu0 %v518
        %804 = vmatpush1.msra.mxu0 %v517
        %805 = vmatprep.subr.mxu0 %v520
        %806 = vmatpush1.msra.mxu0 %v519
        %807 = vmatprep.subr.mxu0 %v522
        %808 = vmatpush1.msra.mxu0 %v521
        %809 = vmatprep.subr.mxu0 %v524
        %810 = vmatpush1.msra.mxu0 %v523
        %811 = vmatprep.subr.mxu0 %v526
        %812 = vmatpush1.msra.mxu0 %v525
        %813 = vmatprep.mubr.f32.mxu0 %v575
        %814 = vmatmul.mubr.f32.gmra.mrb[0].mxu0 %v572
        %v815 = vpop.f32.mrb[0].mxu0
        %v816 = vadd.f32 %v739, %v815
        %v817 = vpop.f32.mrb[0].mxu0
        %v818 = vadd.f32 %v741, %v817
        %819 = vmatprep.mubr.f32.mxu0 %v579
        %820 = vmatmul.mubr.f32.gmra.mrb[0].mxu0 %v577
        %v821 = vpop.f32.mrb[0].mxu0
        %v822 = vadd.f32 %v745, %v821
        %v823 = vpop.f32.mrb[0].mxu0
        %v824 = vadd.f32 %v747, %v823
        %825 = vdwg.mxu0
        %v826 = vadd.f32 %v816, %v822
        %v827 = vrot.slane %v826, 4
        %v828 = vadd.f32 %v826, %v827
        %v829 = vrot.slane %v828, 2
        %v830 = vadd.f32 %v828, %v829
        %v831 = vrot.slane %v830, 1
        %v832 = vadd.f32 %v830, %v831
        %v833 = vadd.f32 %v818, %v824
        %v834 = vrot.slane %v833, 4
        %v835 = vadd.f32 %v833, %v834
        %v836 = vrot.slane %v835, 2
        %v837 = vadd.f32 %v835, %v836
        %v838 = vrot.slane %v837, 1
        %v839 = vadd.f32 %v837, %v838
        %v840 = vmul.f32 %v816, %v816
        %v841 = vmul.f32 %v818, %v818
        %v842 = vmul.f32 %v822, %v822
        %v843 = vmul.f32 %v824, %v824
        %v844 = vadd.f32 %v840, %v842
        %v845 = vrot.slane %v844, 4
        %v846 = vadd.f32 %v844, %v845
        %v847 = vrot.slane %v846, 2
        %v848 = vadd.f32 %v846, %v847
        %v849 = vrot.slane %v848, 1
        %v850 = vadd.f32 %v848, %v849
        %v851 = vadd.f32 %v841, %v843
        %v852 = vrot.slane %v851, 4
        %v853 = vadd.f32 %v851, %v852
        %v854 = vrot.slane %v853, 2
        %v855 = vadd.f32 %v853, %v854
        %v856 = vrot.slane %v855, 1
        %v857 = vadd.f32 %v855, %v856
        %v858 = vsel %vm536, %v832, %v850
        %v859 = vsel %vm536, %v839, %v857
        %860 = vmatprep.subr.mxu0 %v259
        %861 = vmatpush1.msra.mxu0 %v258
        %862 = vmatprep.subr.mxu0 %v261
        %863 = vmatpush1.msra.mxu0 %v260
        %864 = vmatprep.subr.mxu0 %v263
        %865 = vmatpush1.msra.mxu0 %v262
        %866 = vmatprep.subr.mxu0 %v265
        %867 = vmatpush1.msra.mxu0 %v264
        %868 = vmatprep.subr.mxu0 %v267
        %869 = vmatpush1.msra.mxu0 %v266
        %870 = vmatprep.subr.mxu0 %v269
        %871 = vmatpush1.msra.mxu0 %v268
        %872 = vmatprep.subr.mxu0 %v271
        %873 = vmatpush1.msra.mxu0 %v270
        %874 = vmatprep.subr.mxu0 %v273
        %875 = vmatpush1.msra.mxu0 %v272
        %876 = vmatprep.subr.mxu0 %v275
        %877 = vmatpush1.msra.mxu0 %v274
        %878 = vmatprep.subr.mxu0 %v277
        %879 = vmatpush1.msra.mxu0 %v276
        %880 = vmatprep.subr.mxu0 %v279
        %881 = vmatpush1.msra.mxu0 %v278
        %882 = vmatprep.subr.mxu0 %v281
        %883 = vmatpush1.msra.mxu0 %v280
        %884 = vmatprep.subr.mxu0 %v283
        %885 = vmatpush1.msra.mxu0 %v282
        %886 = vmatprep.subr.mxu0 %v285
        %887 = vmatpush1.msra.mxu0 %v284
        %888 = vmatprep.subr.mxu0 %v287
        %889 = vmatpush1.msra.mxu0 %v286
        %890 = vmatprep.subr.mxu0 %v289
        %891 = vmatpush1.msra.mxu0 %v288
        %892 = vmatprep.subr.mxu0 %v291
        %893 = vmatpush1.msra.mxu0 %v290
        %894 = vmatprep.subr.mxu0 %v293
        %895 = vmatpush1.msra.mxu0 %v292
        %896 = vmatprep.subr.mxu0 %v295
        %897 = vmatpush1.msra.mxu0 %v294
        %898 = vmatprep.subr.mxu0 %v297
        %899 = vmatpush1.msra.mxu0 %v296
        %900 = vmatprep.subr.mxu0 %v299
        %901 = vmatpush1.msra.mxu0 %v298
        %902 = vmatprep.subr.mxu0 %v301
        %903 = vmatpush1.msra.mxu0 %v300
        %904 = vmatprep.subr.mxu0 %v303
        %905 = vmatpush1.msra.mxu0 %v302
        %906 = vmatprep.subr.mxu0 %v305
        %907 = vmatpush1.msra.mxu0 %v304
        %908 = vmatprep.subr.mxu0 %v307
        %909 = vmatpush1.msra.mxu0 %v306
        %910 = vmatprep.subr.mxu0 %v309
        %911 = vmatpush1.msra.mxu0 %v308
        %912 = vmatprep.subr.mxu0 %v311
        %913 = vmatpush1.msra.mxu0 %v310
        %914 = vmatprep.subr.mxu0 %v313
        %915 = vmatpush1.msra.mxu0 %v312
        %916 = vmatprep.subr.mxu0 %v315
        %917 = vmatpush1.msra.mxu0 %v314
        %918 = vmatprep.subr.mxu0 %v317
        %919 = vmatpush1.msra.mxu0 %v316
        %920 = vmatprep.subr.mxu0 %v319
        %921 = vmatpush1.msra.mxu0 %v318
        %922 = vmatprep.subr.mxu0 %v321
        %923 = vmatpush1.msra.mxu0 %v320
        %924 = vmatprep.mubr.f32.mxu0 %v859
        %925 = vmatmul.mubr.f32.gmra.mrb[0].mxu0 %v858
        %v926 = vpop.f32.mrb[0].mxu0
        %v927 = vadd.f32 0.0, %v926
        %v928 = vpop.f32.mrb[0].mxu0
        %v929 = vadd.f32 0.0, %v928
        %930 = vdwg.mxu0
        %v931 = vmul.f32 %v927, %v927
        %v932 = vmul.f32 %v929, %v929
        %v935 = vrot.slane %v931, 7
        %v936 = vrot.slane %v932, 7
        %v939 = vsub.f32 %v927, %v935
        %v940 = vsub.f32 %v929, %v936
        %v941 = vmax.f32 %v939, 0.0
        %v942 = vmax.f32 %v940, 0.0
        %v943 = vadd.f32 %v941, 1e-05
        %v944 = vadd.f32 %v942, 1e-05
        %v945 = vrsqrt.pop %v943
        %v946 = vrsqrt.pop %v944
        %v947 = vlaneseq
        %v948 = vshrl.u32 %v947, 7
        %v949 = vsub.s32 0, %v948
        %v950 = vrot.slane %v927, %v949
        %v951 = vlaneseq
        %v952 = vshrl.u32 %v951, 7
        %v953 = vsub.s32 0, %v952
        %v954 = vrot.slane %v929, %v953
        %v955 = vsub.f32 %v816, %v950
        %v956 = vsub.f32 %v818, %v954
        %v957 = vsub.f32 %v822, %v950
        %v958 = vsub.f32 %v824, %v954
        %v960 = vlaneseq
        %v961 = vshrl.u32 %v960, 7
        %v962 = vsub.s32 0, %v961
        %v963 = vrot.slane %v529, %v962
        %v964 = vlaneseq
        %v965 = vshrl.u32 %v964, 7
        %v966 = vsub.s32 1, %v965
        %v967 = vrot.slane %v529, %v966
        %v970 = vmul.f32 %v945, %v963
        %v971 = vmul.f32 %v946, %v967
        %v972 = vlaneseq
        %v973 = vshrl.u32 %v972, 7
        %v974 = vsub.s32 1, %v973
        %v975 = vrot.slane %v970, %v974
        %v976 = vlaneseq
        %v977 = vshrl.u32 %v976, 7
        %v978 = vsub.s32 1, %v977
        %v979 = vrot.slane %v971, %v978
        %v980 = vmul.f32 %v955, %v975
        %v981 = vmul.f32 %v956, %v979
        %v982 = vmul.f32 %v957, %v975
        %v983 = vmul.f32 %v958, %v979
        %v985 = vlaneseq
        %v986 = vshrl.u32 %v985, 7
        %v987 = vsub.s32 0, %v986
        %v988 = vrot.slane %v531, %v987
        %v989 = vlaneseq
        %v990 = vshrl.u32 %v989, 7
        %v991 = vsub.s32 1, %v990
        %v992 = vrot.slane %v531, %v991
        %v995 = vadd.f32 %v980, %v988
        %v996 = vadd.f32 %v981, %v992
        %v997 = vadd.f32 %v982, %v988
        %v998 = vadd.f32 %v983, %v992
        %v999 = vmax.f32 %v995, 0.0
        %v1000 = vmax.f32 %v996, 0.0
        %v1001 = vmax.f32 %v997, 0.0
        %v1002 = vmax.f32 %v998, 0.0
        %s1003 = scalar_lea.vmem [#allocation6], 1536
        %v1004 = vld [vmem:[%s1003] sm:$0xff]
        %v1005 = vld [vmem:[%s1003 + $0x8] sm:$0xff]
        %v1006 = vld [vmem:[%s1003 + $0x10] sm:$0xff]
        %v1007 = vld [vmem:[%s1003 + $0x18] sm:$0xff]
        %v1008 = vld [vmem:[%s1003 + $0x20] sm:$0xff]
        %v1009 = vld [vmem:[%s1003 + $0x28] sm:$0xff]
        %v1010 = vld [vmem:[%s1003 + $0x30] sm:$0xff]
        %v1011 = vld [vmem:[%s1003 + $0x38] sm:$0xff]
        %v1012 = vld [vmem:[%s1003 + $0x40] sm:$0xff]
        %v1013 = vld [vmem:[%s1003 + $0x48] sm:$0xff]
        %v1014 = vld [vmem:[%s1003 + $0x50] sm:$0xff]
        %v1015 = vld [vmem:[%s1003 + $0x58] sm:$0xff]
        %v1016 = vld [vmem:[%s1003 + $0x60] sm:$0xff]
        %v1017 = vld [vmem:[%s1003 + $0x68] sm:$0xff]
        %v1018 = vld [vmem:[%s1003 + $0x70] sm:$0xff]
        %v1019 = vld [vmem:[%s1003 + $0x78] sm:$0xff]
        %v1020 = vld [vmem:[%s1003 + $0x80] sm:$0xff]
        %v1021 = vld [vmem:[%s1003 + $0x88] sm:$0xff]
        %v1022 = vld [vmem:[%s1003 + $0x90] sm:$0xff]
        %v1023 = vld [vmem:[%s1003 + $0x98] sm:$0xff]
        %v1024 = vld [vmem:[%s1003 + $0xa0] sm:$0xff]
        %v1025 = vld [vmem:[%s1003 + $0xa8] sm:$0xff]
        %v1026 = vld [vmem:[%s1003 + $0xb0] sm:$0xff]
        %v1027 = vld [vmem:[%s1003 + $0xb8] sm:$0xff]
        %v1028 = vld [vmem:[%s1003 + $0xc0] sm:$0xff]
        %v1029 = vld [vmem:[%s1003 + $0xc8] sm:$0xff]
        %v1030 = vld [vmem:[%s1003 + $0xd0] sm:$0xff]
        %v1031 = vld [vmem:[%s1003 + $0xd8] sm:$0xff]
        %v1032 = vld [vmem:[%s1003 + $0xe0] sm:$0xff]
        %v1033 = vld [vmem:[%s1003 + $0xe8] sm:$0xff]
        %v1034 = vld [vmem:[%s1003 + $0xf0] sm:$0xff]
        %v1035 = vld [vmem:[%s1003 + $0xf8] sm:$0xff]
        %v1036 = vld [vmem:[%s1003 + $0x100] sm:$0xff]
        %v1037 = vld [vmem:[%s1003 + $0x108] sm:$0xff]
        %v1038 = vld [vmem:[%s1003 + $0x110] sm:$0xff]
        %v1039 = vld [vmem:[%s1003 + $0x118] sm:$0xff]
        %v1040 = vld [vmem:[%s1003 + $0x120] sm:$0xff]
        %v1041 = vld [vmem:[%s1003 + $0x128] sm:$0xff]
        %v1042 = vld [vmem:[%s1003 + $0x130] sm:$0xff]
        %v1043 = vld [vmem:[%s1003 + $0x138] sm:$0xff]
        %v1044 = vld [vmem:[%s1003 + $0x140] sm:$0xff]
        %v1045 = vld [vmem:[%s1003 + $0x148] sm:$0xff]
        %v1046 = vld [vmem:[%s1003 + $0x150] sm:$0xff]
        %v1047 = vld [vmem:[%s1003 + $0x158] sm:$0xff]
        %v1048 = vld [vmem:[%s1003 + $0x160] sm:$0xff]
        %v1049 = vld [vmem:[%s1003 + $0x168] sm:$0xff]
        %v1050 = vld [vmem:[%s1003 + $0x170] sm:$0xff]
        %v1051 = vld [vmem:[%s1003 + $0x178] sm:$0xff]
        %v1052 = vld [vmem:[%s1003 + $0x180] sm:$0xff]
        %v1053 = vld [vmem:[%s1003 + $0x188] sm:$0xff]
        %v1054 = vld [vmem:[%s1003 + $0x190] sm:$0xff]
        %v1055 = vld [vmem:[%s1003 + $0x198] sm:$0xff]
        %v1056 = vld [vmem:[%s1003 + $0x1a0] sm:$0xff]
        %v1057 = vld [vmem:[%s1003 + $0x1a8] sm:$0xff]
        %v1058 = vld [vmem:[%s1003 + $0x1b0] sm:$0xff]
        %v1059 = vld [vmem:[%s1003 + $0x1b8] sm:$0xff]
        %v1060 = vld [vmem:[%s1003 + $0x1c0] sm:$0xff]
        %v1061 = vld [vmem:[%s1003 + $0x1c8] sm:$0xff]
        %v1062 = vld [vmem:[%s1003 + $0x1d0] sm:$0xff]
        %v1063 = vld [vmem:[%s1003 + $0x1d8] sm:$0xff]
        %v1064 = vld [vmem:[%s1003 + $0x1e0] sm:$0xff]
        %v1065 = vld [vmem:[%s1003 + $0x1e8] sm:$0xff]
        %v1066 = vld [vmem:[%s1003 + $0x1f0] sm:$0xff]
        %v1067 = vld [vmem:[%s1003 + $0x1f8] sm:$0xff]
        %v1068 = vld [vmem:[%s1003 + $0x200] sm:$0xff]
        %v1069 = vld [vmem:[%s1003 + $0x208] sm:$0xff]
        %v1070 = vld [vmem:[%s1003 + $0x210] sm:$0xff]
        %v1071 = vld [vmem:[%s1003 + $0x218] sm:$0xff]
        %v1072 = vld [vmem:[%s1003 + $0x220] sm:$0xff]
        %v1073 = vld [vmem:[%s1003 + $0x228] sm:$0xff]
        %v1074 = vld [vmem:[%s1003 + $0x230] sm:$0xff]
        %v1075 = vld [vmem:[%s1003 + $0x238] sm:$0xff]
        %v1076 = vld [vmem:[%s1003 + $0x240] sm:$0xff]
        %v1077 = vld [vmem:[%s1003 + $0x248] sm:$0xff]
        %v1078 = vld [vmem:[%s1003 + $0x250] sm:$0xff]
        %v1079 = vld [vmem:[%s1003 + $0x258] sm:$0xff]
        %v1080 = vld [vmem:[%s1003 + $0x260] sm:$0xff]
        %v1081 = vld [vmem:[%s1003 + $0x268] sm:$0xff]
        %v1082 = vld [vmem:[%s1003 + $0x270] sm:$0xff]
        %v1083 = vld [vmem:[%s1003 + $0x278] sm:$0xff]
        %v1084 = vld [vmem:[%s1003 + $0x280] sm:$0xff]
        %v1085 = vld [vmem:[%s1003 + $0x288] sm:$0xff]
        %v1086 = vld [vmem:[%s1003 + $0x290] sm:$0xff]
        %v1087 = vld [vmem:[%s1003 + $0x298] sm:$0xff]
        %v1088 = vld [vmem:[%s1003 + $0x2a0] sm:$0xff]
        %v1089 = vld [vmem:[%s1003 + $0x2a8] sm:$0xff]
        %v1090 = vld [vmem:[%s1003 + $0x2b0] sm:$0xff]
        %v1091 = vld [vmem:[%s1003 + $0x2b8] sm:$0xff]
        %v1092 = vld [vmem:[%s1003 + $0x2c0] sm:$0xff]
        %v1093 = vld [vmem:[%s1003 + $0x2c8] sm:$0xff]
        %v1094 = vld [vmem:[%s1003 + $0x2d0] sm:$0xff]
        %v1095 = vld [vmem:[%s1003 + $0x2d8] sm:$0xff]
        %v1096 = vld [vmem:[%s1003 + $0x2e0] sm:$0xff]
        %v1097 = vld [vmem:[%s1003 + $0x2e8] sm:$0xff]
        %v1098 = vld [vmem:[%s1003 + $0x2f0] sm:$0xff]
        %v1099 = vld [vmem:[%s1003 + $0x2f8] sm:$0xff]
        %v1100 = vld [vmem:[%s1003 + $0x300] sm:$0xff]
        %v1101 = vld [vmem:[%s1003 + $0x308] sm:$0xff]
        %v1102 = vld [vmem:[%s1003 + $0x310] sm:$0xff]
        %v1103 = vld [vmem:[%s1003 + $0x318] sm:$0xff]
        %v1104 = vld [vmem:[%s1003 + $0x320] sm:$0xff]
        %v1105 = vld [vmem:[%s1003 + $0x328] sm:$0xff]
        %v1106 = vld [vmem:[%s1003 + $0x330] sm:$0xff]
        %v1107 = vld [vmem:[%s1003 + $0x338] sm:$0xff]
        %v1108 = vld [vmem:[%s1003 + $0x340] sm:$0xff]
        %v1109 = vld [vmem:[%s1003 + $0x348] sm:$0xff]
        %v1110 = vld [vmem:[%s1003 + $0x350] sm:$0xff]
        %v1111 = vld [vmem:[%s1003 + $0x358] sm:$0xff]
        %v1112 = vld [vmem:[%s1003 + $0x360] sm:$0xff]
        %v1113 = vld [vmem:[%s1003 + $0x368] sm:$0xff]
        %v1114 = vld [vmem:[%s1003 + $0x370] sm:$0xff]
        %v1115 = vld [vmem:[%s1003 + $0x378] sm:$0xff]
        %v1116 = vld [vmem:[%s1003 + $0x380] sm:$0xff]
        %v1117 = vld [vmem:[%s1003 + $0x388] sm:$0xff]
        %v1118 = vld [vmem:[%s1003 + $0x390] sm:$0xff]
        %v1119 = vld [vmem:[%s1003 + $0x398] sm:$0xff]
        %v1120 = vld [vmem:[%s1003 + $0x3a0] sm:$0xff]
        %v1121 = vld [vmem:[%s1003 + $0x3a8] sm:$0xff]
        %v1122 = vld [vmem:[%s1003 + $0x3b0] sm:$0xff]
        %v1123 = vld [vmem:[%s1003 + $0x3b8] sm:$0xff]
        %v1124 = vld [vmem:[%s1003 + $0x3c0] sm:$0xff]
        %v1125 = vld [vmem:[%s1003 + $0x3c8] sm:$0xff]
        %v1126 = vld [vmem:[%s1003 + $0x3d0] sm:$0xff]
        %v1127 = vld [vmem:[%s1003 + $0x3d8] sm:$0xff]
        %v1128 = vld [vmem:[%s1003 + $0x3e0] sm:$0xff]
        %v1129 = vld [vmem:[%s1003 + $0x3e8] sm:$0xff]
        %v1130 = vld [vmem:[%s1003 + $0x3f0] sm:$0xff]
        %v1131 = vld [vmem:[%s1003 + $0x3f8] sm:$0xff]
        %v1132 = vld [vmem:[%s1003 + $0x400] sm:$0xff]
        %v1133 = vld [vmem:[%s1003 + $0x408] sm:$0xff]
        %v1134 = vld [vmem:[%s1003 + $0x410] sm:$0xff]
        %v1135 = vld [vmem:[%s1003 + $0x418] sm:$0xff]
        %v1136 = vld [vmem:[%s1003 + $0x420] sm:$0xff]
        %v1137 = vld [vmem:[%s1003 + $0x428] sm:$0xff]
        %v1138 = vld [vmem:[%s1003 + $0x430] sm:$0xff]
        %v1139 = vld [vmem:[%s1003 + $0x438] sm:$0xff]
        %v1140 = vld [vmem:[%s1003 + $0x440] sm:$0xff]
        %v1141 = vld [vmem:[%s1003 + $0x448] sm:$0xff]
        %v1142 = vld [vmem:[%s1003 + $0x450] sm:$0xff]
        %v1143 = vld [vmem:[%s1003 + $0x458] sm:$0xff]
        %v1144 = vld [vmem:[%s1003 + $0x460] sm:$0xff]
        %v1145 = vld [vmem:[%s1003 + $0x468] sm:$0xff]
        %v1146 = vld [vmem:[%s1003 + $0x470] sm:$0xff]
        %v1147 = vld [vmem:[%s1003 + $0x478] sm:$0xff]
        %v1148 = vld [vmem:[%s1003 + $0x480] sm:$0xff]
        %v1149 = vld [vmem:[%s1003 + $0x488] sm:$0xff]
        %v1150 = vld [vmem:[%s1003 + $0x490] sm:$0xff]
        %v1151 = vld [vmem:[%s1003 + $0x498] sm:$0xff]
        %v1152 = vld [vmem:[%s1003 + $0x4a0] sm:$0xff]
        %v1153 = vld [vmem:[%s1003 + $0x4a8] sm:$0xff]
        %v1154 = vld [vmem:[%s1003 + $0x4b0] sm:$0xff]
        %v1155 = vld [vmem:[%s1003 + $0x4b8] sm:$0xff]
        %v1156 = vld [vmem:[%s1003 + $0x4c0] sm:$0xff]
        %v1157 = vld [vmem:[%s1003 + $0x4c8] sm:$0xff]
        %v1158 = vld [vmem:[%s1003 + $0x4d0] sm:$0xff]
        %v1159 = vld [vmem:[%s1003 + $0x4d8] sm:$0xff]
        %v1160 = vld [vmem:[%s1003 + $0x4e0] sm:$0xff]
        %v1161 = vld [vmem:[%s1003 + $0x4e8] sm:$0xff]
        %v1162 = vld [vmem:[%s1003 + $0x4f0] sm:$0xff]
        %v1163 = vld [vmem:[%s1003 + $0x4f8] sm:$0xff]
        %v1164 = vld [vmem:[%s1003 + $0x500] sm:$0xff]
        %v1165 = vld [vmem:[%s1003 + $0x508] sm:$0xff]
        %v1166 = vld [vmem:[%s1003 + $0x510] sm:$0xff]
        %v1167 = vld [vmem:[%s1003 + $0x518] sm:$0xff]
        %v1168 = vld [vmem:[%s1003 + $0x520] sm:$0xff]
        %v1169 = vld [vmem:[%s1003 + $0x528] sm:$0xff]
        %v1170 = vld [vmem:[%s1003 + $0x530] sm:$0xff]
        %v1171 = vld [vmem:[%s1003 + $0x538] sm:$0xff]
        %v1172 = vld [vmem:[%s1003 + $0x540] sm:$0xff]
        %v1173 = vld [vmem:[%s1003 + $0x548] sm:$0xff]
        %v1174 = vld [vmem:[%s1003 + $0x550] sm:$0xff]
        %v1175 = vld [vmem:[%s1003 + $0x558] sm:$0xff]
        %v1176 = vld [vmem:[%s1003 + $0x560] sm:$0xff]
        %v1177 = vld [vmem:[%s1003 + $0x568] sm:$0xff]
        %v1178 = vld [vmem:[%s1003 + $0x570] sm:$0xff]
        %v1179 = vld [vmem:[%s1003 + $0x578] sm:$0xff]
        %v1180 = vld [vmem:[%s1003 + $0x580] sm:$0xff]
        %v1181 = vld [vmem:[%s1003 + $0x588] sm:$0xff]
        %v1182 = vld [vmem:[%s1003 + $0x590] sm:$0xff]
        %v1183 = vld [vmem:[%s1003 + $0x598] sm:$0xff]
        %v1184 = vld [vmem:[%s1003 + $0x5a0] sm:$0xff]
        %v1185 = vld [vmem:[%s1003 + $0x5a8] sm:$0xff]
        %v1186 = vld [vmem:[%s1003 + $0x5b0] sm:$0xff]
        %v1187 = vld [vmem:[%s1003 + $0x5b8] sm:$0xff]
        %v1188 = vld [vmem:[%s1003 + $0x5c0] sm:$0xff]
        %v1189 = vld [vmem:[%s1003 + $0x5c8] sm:$0xff]
        %v1190 = vld [vmem:[%s1003 + $0x5d0] sm:$0xff]
        %v1191 = vld [vmem:[%s1003 + $0x5d8] sm:$0xff]
        %v1192 = vld [vmem:[%s1003 + $0x5e0] sm:$0xff]
        %v1193 = vld [vmem:[%s1003 + $0x5e8] sm:$0xff]
        %v1194 = vld [vmem:[%s1003 + $0x5f0] sm:$0xff]
        %v1195 = vld [vmem:[%s1003 + $0x5f8] sm:$0xff]
        %s1196 = scalar_lea.vmem [#allocation9], 3
        %v1197 = vld [vmem:[%s1196] ss:$8 sm:$0x3]
        %s1198 = scalar_lea.vmem [#allocation9], 4
        %v1199 = vld [vmem:[%s1198] ss:$8 sm:$0x3]
        %s1200 = scalar_lea.vmem [#allocation9], 5
        %v1201 = vld [vmem:[%s1200] ss:$8 sm:$0x3]
        %v1206 = vrot.slane %v999, 7
        %v1207 = vrot.slane %v1000, 7
        %v1208 = vrot.slane %v1001, 7
        %v1209 = vsel %vm536, %v1206, %v1208
        %v1210 = vrot.slane %v1002, 7
        %v1211 = vsel %vm536, %v1207, %v1210
        %1218 = vst [vmem:[#allocation2] sm:$0xfe] %v1206
        %1219 = vst [vmem:[#allocation2 + $0x8] sm:$0xfe] %v1207
        %1220 = vst [vmem:[#allocation2 + $0x10] sm:$0xff] %v1209
        %1221 = vst [vmem:[#allocation2 + $0x18] sm:$0xff] %v1211
        %1222 = vst [vmem:[#allocation2 + $0x20] sm:$0x1] %v1208
        %1223 = vst [vmem:[#allocation2 + $0x28] sm:$0x1] %v1210
        %v1224 = vld [vmem:[#allocation2] sm:$0xff]
        %v1225 = vld [vmem:[#allocation2 + $0x8] sm:$0xff]
        %v1226 = vld [vmem:[#allocation2 + $0x10] sm:$0xff]
        %v1227 = vld [vmem:[#allocation2 + $0x18] sm:$0xff]
        %v1228 = vld [vmem:[#allocation2] sm:$0xfc]
        %v1229 = vld [vmem:[#allocation2 + $0x8] sm:$0xfc]
        %v1230 = vld [vmem:[#allocation2 + $0x20] sm:$0x3]
        %v1231 = vld [vmem:[#allocation2 + $0x28] sm:$0x3]
        %v1238 = vrot.slane %v1228, 2
        %v1239 = vrot.slane %v1226, 2
        %v1240 = vsel %vm569, %v1238, %v1239
        %v1241 = vrot.slane %v1229, 2
        %v1242 = vrot.slane %v1227, 2
        %v1243 = vsel %vm569, %v1241, %v1242
        %v1244 = vrot.slane %v1230, 2
        %v1245 = vsel %vm569, %v1239, %v1244
        %v1246 = vrot.slane %v1231, 2
        %v1247 = vsel %vm569, %v1242, %v1246
        %v1253 = vlaneseq
        %v1254 = vshrl.u32 %v1253, 7
        %v1255 = vsub.s32 0, %v1254
        %v1256 = vrot.slane %v1197, %v1255
        %v1257 = vlaneseq
        %v1258 = vshrl.u32 %v1257, 7
        %v1259 = vsub.s32 1, %v1258
        %v1260 = vrot.slane %v1197, %v1259
        %1263 = vmatprep.subr.mxu0 %v1005
        %1264 = vmatpush1.msra.mxu0 %v1004
        %1265 = vmatprep.subr.mxu0 %v1007
        %1266 = vmatpush1.msra.mxu0 %v1006
        %1267 = vmatprep.subr.mxu0 %v1009
        %1268 = vmatpush1.msra.mxu0 %v1008
        %1269 = vmatprep.subr.mxu0 %v1011
        %1270 = vmatpush1.msra.mxu0 %v1010
        %1271 = vmatprep.subr.mxu0 %v1013
        %1272 = vmatpush1.msra.mxu0 %v1012
        %1273 = vmatprep.subr.mxu0 %v1015
        %1274 = vmatpush1.msra.mxu0 %v1014
        %1275 = vmatprep.subr.mxu0 %v1017
        %1276 = vmatpush1.msra.mxu0 %v1016
        %1277 = vmatprep.subr.mxu0 %v1019
        %1278 = vmatpush1.msra.mxu0 %v1018
        %1279 = vmatprep.subr.mxu0 %v1021
        %1280 = vmatpush1.msra.mxu0 %v1020
        %1281 = vmatprep.subr.mxu0 %v1023
        %1282 = vmatpush1.msra.mxu0 %v1022
        %1283 = vmatprep.subr.mxu0 %v1025
        %1284 = vmatpush1.msra.mxu0 %v1024
        %1285 = vmatprep.subr.mxu0 %v1027
        %1286 = vmatpush1.msra.mxu0 %v1026
        %1287 = vmatprep.subr.mxu0 %v1029
        %1288 = vmatpush1.msra.mxu0 %v1028
        %1289 = vmatprep.subr.mxu0 %v1031
        %1290 = vmatpush1.msra.mxu0 %v1030
        %1291 = vmatprep.subr.mxu0 %v1033
        %1292 = vmatpush1.msra.mxu0 %v1032
        %1293 = vmatprep.subr.mxu0 %v1035
        %1294 = vmatpush1.msra.mxu0 %v1034
        %1295 = vmatprep.subr.mxu0 %v1037
        %1296 = vmatpush1.msra.mxu0 %v1036
        %1297 = vmatprep.subr.mxu0 %v1039
        %1298 = vmatpush1.msra.mxu0 %v1038
        %1299 = vmatprep.subr.mxu0 %v1041
        %1300 = vmatpush1.msra.mxu0 %v1040
        %1301 = vmatprep.subr.mxu0 %v1043
        %1302 = vmatpush1.msra.mxu0 %v1042
        %1303 = vmatprep.subr.mxu0 %v1045
        %1304 = vmatpush1.msra.mxu0 %v1044
        %1305 = vmatprep.subr.mxu0 %v1047
        %1306 = vmatpush1.msra.mxu0 %v1046
        %1307 = vmatprep.subr.mxu0 %v1049
        %1308 = vmatpush1.msra.mxu0 %v1048
        %1309 = vmatprep.subr.mxu0 %v1051
        %1310 = vmatpush1.msra.mxu0 %v1050
        %1311 = vmatprep.subr.mxu0 %v1053
        %1312 = vmatpush1.msra.mxu0 %v1052
        %1313 = vmatprep.subr.mxu0 %v1055
        %1314 = vmatpush1.msra.mxu0 %v1054
        %1315 = vmatprep.subr.mxu0 %v1057
        %1316 = vmatpush1.msra.mxu0 %v1056
        %1317 = vmatprep.subr.mxu0 %v1059
        %1318 = vmatpush1.msra.mxu0 %v1058
        %1319 = vmatprep.subr.mxu0 %v1061
        %1320 = vmatpush1.msra.mxu0 %v1060
        %1321 = vmatprep.subr.mxu0 %v1063
        %1322 = vmatpush1.msra.mxu0 %v1062
        %1323 = vmatprep.subr.mxu0 %v1065
        %1324 = vmatpush1.msra.mxu0 %v1064
        %1325 = vmatprep.subr.mxu0 %v1067
        %1326 = vmatpush1.msra.mxu0 %v1066
        %1327 = vmatprep.mubr.f32.mxu0 %v1225
        %1328 = vmatmul.mubr.f32.gmra.mrb[0].mxu0 %v1224
        %v1329 = vpop.f32.mrb[0].mxu0
        %v1330 = vadd.f32 %v1256, %v1329
        %v1331 = vpop.f32.mrb[0].mxu0
        %v1332 = vadd.f32 %v1260, %v1331
        %1333 = vmatprep.mubr.f32.mxu0 %v1227
        %1334 = vmatmul.mubr.f32.gmra.mrb[0].mxu0 %v1226
        %v1335 = vpop.f32.mrb[0].mxu0
        %v1336 = vadd.f32 %v1256, %v1335
        %v1337 = vpop.f32.mrb[0].mxu0
        %v1338 = vadd.f32 %v1260, %v1337
        %1339 = vdwg.mxu0
        %1340 = vmatprep.subr.mxu0 %v1069
        %1341 = vmatpush1.msra.mxu0 %v1068
        %1342 = vmatprep.subr.mxu0 %v1071
        %1343 = vmatpush1.msra.mxu0 %v1070
        %1344 = vmatprep.subr.mxu0 %v1073
        %1345 = vmatpush1.msra.mxu0 %v1072
        %1346 = vmatprep.subr.mxu0 %v1075
        %1347 = vmatpush1.msra.mxu0 %v1074
        %1348 = vmatprep.subr.mxu0 %v1077
        %1349 = vmatpush1.msra.mxu0 %v1076
        %1350 = vmatprep.subr.mxu0 %v1079
        %1351 = vmatpush1.msra.mxu0 %v1078
        %1352 = vmatprep.subr.mxu0 %v1081
        %1353 = vmatpush1.msra.mxu0 %v1080
        %1354 = vmatprep.subr.mxu0 %v1083
        %1355 = vmatpush1.msra.mxu0 %v1082
        %1356 = vmatprep.subr.mxu0 %v1085
        %1357 = vmatpush1.msra.mxu0 %v1084
        %1358 = vmatprep.subr.mxu0 %v1087
        %1359 = vmatpush1.msra.mxu0 %v1086
        %1360 = vmatprep.subr.mxu0 %v1089
        %1361 = vmatpush1.msra.mxu0 %v1088
        %1362 = vmatprep.subr.mxu0 %v1091
        %1363 = vmatpush1.msra.mxu0 %v1090
        %1364 = vmatprep.subr.mxu0 %v1093
        %1365 = vmatpush1.msra.mxu0 %v1092
        %1366 = vmatprep.subr.mxu0 %v1095
        %1367 = vmatpush1.msra.mxu0 %v1094
        %1368 = vmatprep.subr.mxu0 %v1097
        %1369 = vmatpush1.msra.mxu0 %v1096
        %1370 = vmatprep.subr.mxu0 %v1099
        %1371 = vmatpush1.msra.mxu0 %v1098
        %1372 = vmatprep.subr.mxu0 %v1101
        %1373 = vmatpush1.msra.mxu0 %v1100
        %1374 = vmatprep.subr.mxu0 %v1103
        %1375 = vmatpush1.msra.mxu0 %v1102
        %1376 = vmatprep.subr.mxu0 %v1105
        %1377 = vmatpush1.msra.mxu0 %v1104
        %1378 = vmatprep.subr.mxu0 %v1107
        %1379 = vmatpush1.msra.mxu0 %v1106
        %1380 = vmatprep.subr.mxu0 %v1109
        %1381 = vmatpush1.msra.mxu0 %v1108
        %1382 = vmatprep.subr.mxu0 %v1111
        %1383 = vmatpush1.msra.mxu0 %v1110
        %1384 = vmatprep.subr.mxu0 %v1113
        %1385 = vmatpush1.msra.mxu0 %v1112
        %1386 = vmatprep.subr.mxu0 %v1115
        %1387 = vmatpush1.msra.mxu0 %v1114
        %1388 = vmatprep.subr.mxu0 %v1117
        %1389 = vmatpush1.msra.mxu0 %v1116
        %1390 = vmatprep.subr.mxu0 %v1119
        %1391 = vmatpush1.msra.mxu0 %v1118
        %1392 = vmatprep.subr.mxu0 %v1121
        %1393 = vmatpush1.msra.mxu0 %v1120
        %1394 = vmatprep.subr.mxu0 %v1123
        %1395 = vmatpush1.msra.mxu0 %v1122
        %1396 = vmatprep.subr.mxu0 %v1125
        %1397 = vmatpush1.msra.mxu0 %v1124
        %1398 = vmatprep.subr.mxu0 %v1127
        %1399 = vmatpush1.msra.mxu0 %v1126
        %1400 = vmatprep.subr.mxu0 %v1129
        %1401 = vmatpush1.msra.mxu0 %v1128
        %1402 = vmatprep.subr.mxu0 %v1131
        %1403 = vmatpush1.msra.mxu0 %v1130
        %1404 = vmatprep.mubr.f32.mxu0 %v1000
        %1405 = vmatmul.mubr.f32.gmra.mrb[0].mxu0 %v999
        %v1406 = vpop.f32.mrb[0].mxu0
        %v1407 = vadd.f32 %v1330, %v1406
        %v1408 = vpop.f32.mrb[0].mxu0
        %v1409 = vadd.f32 %v1332, %v1408
        %1410 = vmatprep.mubr.f32.mxu0 %v1002
        %1411 = vmatmul.mubr.f32.gmra.mrb[0].mxu0 %v1001
        %v1412 = vpop.f32.mrb[0].mxu0
        %v1413 = vadd.f32 %v1336, %v1412
        %v1414 = vpop.f32.mrb[0].mxu0
        %v1415 = vadd.f32 %v1338, %v1414
        %1416 = vdwg.mxu0
        %1417 = vmatprep.subr.mxu0 %v1133
        %1418 = vmatpush1.msra.mxu0 %v1132
        %1419 = vmatprep.subr.mxu0 %v1135
        %1420 = vmatpush1.msra.mxu0 %v1134
        %1421 = vmatprep.subr.mxu0 %v1137
        %1422 = vmatpush1.msra.mxu0 %v1136
        %1423 = vmatprep.subr.mxu0 %v1139
        %1424 = vmatpush1.msra.mxu0 %v1138
        %1425 = vmatprep.subr.mxu0 %v1141
        %1426 = vmatpush1.msra.mxu0 %v1140
        %1427 = vmatprep.subr.mxu0 %v1143
        %1428 = vmatpush1.msra.mxu0 %v1142
        %1429 = vmatprep.subr.mxu0 %v1145
        %1430 = vmatpush1.msra.mxu0 %v1144
        %1431 = vmatprep.subr.mxu0 %v1147
        %1432 = vmatpush1.msra.mxu0 %v1146
        %1433 = vmatprep.subr.mxu0 %v1149
        %1434 = vmatpush1.msra.mxu0 %v1148
        %1435 = vmatprep.subr.mxu0 %v1151
        %1436 = vmatpush1.msra.mxu0 %v1150
        %1437 = vmatprep.subr.mxu0 %v1153
        %1438 = vmatpush1.msra.mxu0 %v1152
        %1439 = vmatprep.subr.mxu0 %v1155
        %1440 = vmatpush1.msra.mxu0 %v1154
        %1441 = vmatprep.subr.mxu0 %v1157
        %1442 = vmatpush1.msra.mxu0 %v1156
        %1443 = vmatprep.subr.mxu0 %v1159
        %1444 = vmatpush1.msra.mxu0 %v1158
        %1445 = vmatprep.subr.mxu0 %v1161
        %1446 = vmatpush1.msra.mxu0 %v1160
        %1447 = vmatprep.subr.mxu0 %v1163
        %1448 = vmatpush1.msra.mxu0 %v1162
        %1449 = vmatprep.subr.mxu0 %v1165
        %1450 = vmatpush1.msra.mxu0 %v1164
        %1451 = vmatprep.subr.mxu0 %v1167
        %1452 = vmatpush1.msra.mxu0 %v1166
        %1453 = vmatprep.subr.mxu0 %v1169
        %1454 = vmatpush1.msra.mxu0 %v1168
        %1455 = vmatprep.subr.mxu0 %v1171
        %1456 = vmatpush1.msra.mxu0 %v1170
        %1457 = vmatprep.subr.mxu0 %v1173
        %1458 = vmatpush1.msra.mxu0 %v1172
        %1459 = vmatprep.subr.mxu0 %v1175
        %1460 = vmatpush1.msra.mxu0 %v1174
        %1461 = vmatprep.subr.mxu0 %v1177
        %1462 = vmatpush1.msra.mxu0 %v1176
        %1463 = vmatprep.subr.mxu0 %v1179
        %1464 = vmatpush1.msra.mxu0 %v1178
        %1465 = vmatprep.subr.mxu0 %v1181
        %1466 = vmatpush1.msra.mxu0 %v1180
        %1467 = vmatprep.subr.mxu0 %v1183
        %1468 = vmatpush1.msra.mxu0 %v1182
        %1469 = vmatprep.subr.mxu0 %v1185
        %1470 = vmatpush1.msra.mxu0 %v1184
        %1471 = vmatprep.subr.mxu0 %v1187
        %1472 = vmatpush1.msra.mxu0 %v1186
        %1473 = vmatprep.subr.mxu0 %v1189
        %1474 = vmatpush1.msra.mxu0 %v1188
        %1475 = vmatprep.subr.mxu0 %v1191
        %1476 = vmatpush1.msra.mxu0 %v1190
        %1477 = vmatprep.subr.mxu0 %v1193
        %1478 = vmatpush1.msra.mxu0 %v1192
        %1479 = vmatprep.subr.mxu0 %v1195
        %1480 = vmatpush1.msra.mxu0 %v1194
        %1481 = vmatprep.mubr.f32.mxu0 %v1243
        %1482 = vmatmul.mubr.f32.gmra.mrb[0].mxu0 %v1240
        %v1483 = vpop.f32.mrb[0].mxu0
        %v1484 = vadd.f32 %v1407, %v1483
        %v1485 = vpop.f32.mrb[0].mxu0
        %v1486 = vadd.f32 %v1409, %v1485
        %1487 = vmatprep.mubr.f32.mxu0 %v1247
        %1488 = vmatmul.mubr.f32.gmra.mrb[0].mxu0 %v1245
        %v1489 = vpop.f32.mrb[0].mxu0
        %v1490 = vadd.f32 %v1413, %v1489
        %v1491 = vpop.f32.mrb[0].mxu0
        %v1492 = vadd.f32 %v1415, %v1491
        %1493 = vdwg.mxu0
        %v1494 = vadd.f32 %v1484, %v1490
        %v1495 = vrot.slane %v1494, 4
        %v1496 = vadd.f32 %v1494, %v1495
        %v1497 = vrot.slane %v1496, 2
        %v1498 = vadd.f32 %v1496, %v1497
        %v1499 = vrot.slane %v1498, 1
        %v1500 = vadd.f32 %v1498, %v1499
        %v1501 = vadd.f32 %v1486, %v1492
        %v1502 = vrot.slane %v1501, 4
        %v1503 = vadd.f32 %v1501, %v1502
        %v1504 = vrot.slane %v1503, 2
        %v1505 = vadd.f32 %v1503, %v1504
        %v1506 = vrot.slane %v1505, 1
        %v1507 = vadd.f32 %v1505, %v1506
        %v1508 = vmul.f32 %v1484, %v1484
        %v1509 = vmul.f32 %v1486, %v1486
        %v1510 = vmul.f32 %v1490, %v1490
        %v1511 = vmul.f32 %v1492, %v1492
        %v1512 = vadd.f32 %v1508, %v1510
        %v1513 = vrot.slane %v1512, 4
        %v1514 = vadd.f32 %v1512, %v1513
        %v1515 = vrot.slane %v1514, 2
        %v1516 = vadd.f32 %v1514, %v1515
        %v1517 = vrot.slane %v1516, 1
        %v1518 = vadd.f32 %v1516, %v1517
        %v1519 = vadd.f32 %v1509, %v1511
        %v1520 = vrot.slane %v1519, 4
        %v1521 = vadd.f32 %v1519, %v1520
        %v1522 = vrot.slane %v1521, 2
        %v1523 = vadd.f32 %v1521, %v1522
        %v1524 = vrot.slane %v1523, 1
        %v1525 = vadd.f32 %v1523, %v1524
        %v1526 = vsel %vm536, %v1500, %v1518
        %v1527 = vsel %vm536, %v1507, %v1525
        %1528 = vmatprep.subr.mxu0 %v259
        %1529 = vmatpush1.msra.mxu0 %v258
        %1530 = vmatprep.subr.mxu0 %v261
        %1531 = vmatpush1.msra.mxu0 %v260
        %1532 = vmatprep.subr.mxu0 %v263
        %1533 = vmatpush1.msra.mxu0 %v262
        %1534 = vmatprep.subr.mxu0 %v265
        %1535 = vmatpush1.msra.mxu0 %v264
        %1536 = vmatprep.subr.mxu0 %v267
        %1537 = vmatpush1.msra.mxu0 %v266
        %1538 = vmatprep.subr.mxu0 %v269
        %1539 = vmatpush1.msra.mxu0 %v268
        %1540 = vmatprep.subr.mxu0 %v271
        %1541 = vmatpush1.msra.mxu0 %v270
        %1542 = vmatprep.subr.mxu0 %v273
        %1543 = vmatpush1.msra.mxu0 %v272
        %1544 = vmatprep.subr.mxu0 %v275
        %1545 = vmatpush1.msra.mxu0 %v274
        %1546 = vmatprep.subr.mxu0 %v277
        %1547 = vmatpush1.msra.mxu0 %v276
        %1548 = vmatprep.subr.mxu0 %v279
        %1549 = vmatpush1.msra.mxu0 %v278
        %1550 = vmatprep.subr.mxu0 %v281
        %1551 = vmatpush1.msra.mxu0 %v280
        %1552 = vmatprep.subr.mxu0 %v283
        %1553 = vmatpush1.msra.mxu0 %v282
        %1554 = vmatprep.subr.mxu0 %v285
        %1555 = vmatpush1.msra.mxu0 %v284
        %1556 = vmatprep.subr.mxu0 %v287
        %1557 = vmatpush1.msra.mxu0 %v286
        %1558 = vmatprep.subr.mxu0 %v289
        %1559 = vmatpush1.msra.mxu0 %v288
        %1560 = vmatprep.subr.mxu0 %v291
        %1561 = vmatpush1.msra.mxu0 %v290
        %1562 = vmatprep.subr.mxu0 %v293
        %1563 = vmatpush1.msra.mxu0 %v292
        %1564 = vmatprep.subr.mxu0 %v295
        %1565 = vmatpush1.msra.mxu0 %v294
        %1566 = vmatprep.subr.mxu0 %v297
        %1567 = vmatpush1.msra.mxu0 %v296
        %1568 = vmatprep.subr.mxu0 %v299
        %1569 = vmatpush1.msra.mxu0 %v298
        %1570 = vmatprep.subr.mxu0 %v301
        %1571 = vmatpush1.msra.mxu0 %v300
        %1572 = vmatprep.subr.mxu0 %v303
        %1573 = vmatpush1.msra.mxu0 %v302
        %1574 = vmatprep.subr.mxu0 %v305
        %1575 = vmatpush1.msra.mxu0 %v304
        %1576 = vmatprep.subr.mxu0 %v307
        %1577 = vmatpush1.msra.mxu0 %v306
        %1578 = vmatprep.subr.mxu0 %v309
        %1579 = vmatpush1.msra.mxu0 %v308
        %1580 = vmatprep.subr.mxu0 %v311
        %1581 = vmatpush1.msra.mxu0 %v310
        %1582 = vmatprep.subr.mxu0 %v313
        %1583 = vmatpush1.msra.mxu0 %v312
        %1584 = vmatprep.subr.mxu0 %v315
        %1585 = vmatpush1.msra.mxu0 %v314
        %1586 = vmatprep.subr.mxu0 %v317
        %1587 = vmatpush1.msra.mxu0 %v316
        %1588 = vmatprep.subr.mxu0 %v319
        %1589 = vmatpush1.msra.mxu0 %v318
        %1590 = vmatprep.subr.mxu0 %v321
        %1591 = vmatpush1.msra.mxu0 %v320
        %1592 = vmatprep.mubr.f32.mxu0 %v1527
        %1593 = vmatmul.mubr.f32.gmra.mrb[0].mxu0 %v1526
        %v1594 = vpop.f32.mrb[0].mxu0
        %v1595 = vadd.f32 0.0, %v1594
        %v1596 = vpop.f32.mrb[0].mxu0
        %v1597 = vadd.f32 0.0, %v1596
        %1598 = vdwg.mxu0
        %v1599 = vmul.f32 %v1595, %v1595
        %v1600 = vmul.f32 %v1597, %v1597
        %v1603 = vrot.slane %v1599, 7
        %v1604 = vrot.slane %v1600, 7
        %v1607 = vsub.f32 %v1595, %v1603
        %v1608 = vsub.f32 %v1597, %v1604
        %v1609 = vmax.f32 %v1607, 0.0
        %v1610 = vmax.f32 %v1608, 0.0
        %v1611 = vadd.f32 %v1609, 1e-05
        %v1612 = vadd.f32 %v1610, 1e-05
        %v1613 = vrsqrt.pop %v1611
        %v1614 = vrsqrt.pop %v1612
        %v1615 = vlaneseq
        %v1616 = vshrl.u32 %v1615, 7
        %v1617 = vsub.s32 0, %v1616
        %v1618 = vrot.slane %v1595, %v1617
        %v1619 = vlaneseq
        %v1620 = vshrl.u32 %v1619, 7
        %v1621 = vsub.s32 0, %v1620
        %v1622 = vrot.slane %v1597, %v1621
        %v1623 = vsub.f32 %v1484, %v1618
        %v1624 = vsub.f32 %v1486, %v1622
        %v1625 = vsub.f32 %v1490, %v1618
        %v1626 = vsub.f32 %v1492, %v1622
        %v1628 = vlaneseq
        %v1629 = vshrl.u32 %v1628, 7
        %v1630 = vsub.s32 0, %v1629
        %v1631 = vrot.slane %v1199, %v1630
        %v1632 = vlaneseq
        %v1633 = vshrl.u32 %v1632, 7
        %v1634 = vsub.s32 1, %v1633
        %v1635 = vrot.slane %v1199, %v1634
        %v1638 = vmul.f32 %v1613, %v1631
        %v1639 = vmul.f32 %v1614, %v1635
        %v1640 = vlaneseq
        %v1641 = vshrl.u32 %v1640, 7
        %v1642 = vsub.s32 1, %v1641
        %v1643 = vrot.slane %v1638, %v1642
        %v1644 = vlaneseq
        %v1645 = vshrl.u32 %v1644, 7
        %v1646 = vsub.s32 1, %v1645
        %v1647 = vrot.slane %v1639, %v1646
        %v1648 = vmul.f32 %v1623, %v1643
        %v1649 = vmul.f32 %v1624, %v1647
        %v1650 = vmul.f32 %v1625, %v1643
        %v1651 = vmul.f32 %v1626, %v1647
        %v1653 = vlaneseq
        %v1654 = vshrl.u32 %v1653, 7
        %v1655 = vsub.s32 0, %v1654
        %v1656 = vrot.slane %v1201, %v1655
        %v1657 = vlaneseq
        %v1658 = vshrl.u32 %v1657, 7
        %v1659 = vsub.s32 1, %v1658
        %v1660 = vrot.slane %v1201, %v1659
        %v1663 = vadd.f32 %v1648, %v1656
        %v1664 = vadd.f32 %v1649, %v1660
        %v1665 = vadd.f32 %v1650, %v1656
        %v1666 = vadd.f32 %v1651, %v1660
        %v1667 = vmax.f32 %v1663, 0.0
        %v1668 = vmax.f32 %v1664, 0.0
        %v1669 = vmax.f32 %v1665, 0.0
        %v1670 = vmax.f32 %v1666, 0.0
        %v1671 = vadd.f32 %v331, %v1667
        %v1672 = vadd.f32 %v332, %v1668
        %v1673 = vadd.f32 %v333, %v1669
        %v1674 = vadd.f32 %v334, %v1670
        %v1675 = vmax.f32 %v1671, 0.0
        %v1676 = vmax.f32 %v1672, 0.0
        %v1677 = vmax.f32 %v1673, 0.0
        %v1678 = vmax.f32 %v1674, 0.0
        %1679 = vst [vmem:[%s257] sm:$0xff] %v1675
        %1680 = vst [vmem:[%s257 + $0x8] sm:$0xff] %v1676
        %1681 = vst [vmem:[%s257 + $0x10] sm:$0xff] %v1677
        %1682 = vst [vmem:[%s257 + $0x18] sm:$0xff] %v1678
        %s1683 = sand.u32 %s120, 1
        %s1684 = scalar_lea.sflag [#allocation5], %s1683
        %s1685 = sand.u32 %s120, 1
        %s1686 = smul.addr %s1685, 32
        %s1687 = scalar_lea.vmem [#allocation11], %s1686
        // Predicated region
        $region53: #{tpu_custom_call.1} parent=35 // pred_check
          %p1688 = pneg %p130
        $region54: #{tpu_custom_call.1} parent=35 // pred_check_branch
          %1690 = sbr.rel (%p1688) target = $region56
        $region55: #{tpu_custom_call.1} parent=35 // pred_region
          %s1692 = ssub.s32 512, 512
          %1693 = vsyncadd %s1684, %s1692
          %s1694 = smul.addr %s23, 4
          %s1695 = smul.addr %s1694, 128
          %s1696 = scalar_lea.hbm %s4, %s1695
          %s1697 = sshll.u32 %s1687, 4
          %s1698 = int_to_ptr.vmem [resolvable:$true] %s1697
          %1703 = dma.vmem_to_hbm [thread:$0]  %s1698, 512, %s1696, %s1684, 256, 256, 16
        $region56: #{tpu_custom_call.1} parent=35 // pred_fallthru
          _
      $region36: #{tpu_custom_call.1} parent=5 // pred_fallthru
        _
      %p1704 = scmp.le.s32.totalorder 2, %s18
      // Predicated region
      $region57: #{tpu_custom_call.1} parent=5 // pred_check
        %p1705 = pneg %p1704
      $region58: #{tpu_custom_call.1} parent=5 // pred_check_branch
        %1707 = sbr.rel (%p1705) target = $region60
      $region59: #{tpu_custom_call.1} parent=5 // pred_region
        %s1708 = ssub.s32 %s18, 2
        // Predicated region
        $region61: #{tpu_custom_call.1} parent=59 // pred_check
          %p1709 = pneg %p136
        $region62: #{tpu_custom_call.1} parent=59 // pred_check_branch
          %1711 = sbr.rel (%p1709) target = $region64
        $region63: #{tpu_custom_call.1} parent=59 // pred_region
          %s1712 = sand.u32 %s121, 1
          %s1713 = scalar_lea.sflag [#allocation5], %s1712
          %s1714 = sand.u32 %s121, 1
          %s1715 = smul.addr %s1714, 32
          %s1716 = scalar_lea.vmem [#allocation11], %s1715
          %1717 = dma.done %s1713, 512
        $region64: #{tpu_custom_call.1} parent=59 // pred_fallthru
          _
      $region60: #{tpu_custom_call.1} parent=5 // pred_fallthru
        _
    $region6: #{tpu_custom_call.1} parent=1 // loop_footer
      %s22 = sadd.s32 1, %s18
    $region7: #{tpu_custom_call.1} parent=1 // loop_footer_branch
      %17 = sbr.rel target = $region3
    $region8: #{tpu_custom_call.1} parent=1 // loop_exit
      _
    %1718 = vsyncpa [#allocation4], 1
    %s1719 = scalar_lea.sflag [#allocation4], 1
    %1720 = vsyncpa %s1719, 1
    %1721 = vsyncpa [#allocation7], 1
    %1722 = vsyncpa [#allocation10], 1
    %1723 = vsyncpa [#allocation5], 1
    %s1724 = scalar_lea.sflag [#allocation5], 1
    %1725 = vsyncpa %s1724, 1

</llo_original>
